<compile_context>
chip_gen: v7x
topology: tpu7x:2x2x1
jax: 0.10.0
libtpu: 0.0.40
codegen_flags: <defaults>
</compile_context>

<pallas_src>
import functools
from types import SimpleNamespace

import jax
import jax.numpy as jnp
from jax import lax
from jax.experimental import pallas as pl
from jax.experimental.pallas import tpu as pltpu


# ----------------------------------------------------------------------------
# Fused forward kernel
# ----------------------------------------------------------------------------
def _fused_forward_kernel(gidx_ref,                         # (M,) int32 SMEM (scalar prefetch)
                          x_ref, lw_ref, lb_ref, rw_ref, rb_ref, tgt_ref, pv_ref,
                          z_ref, loss_ref,
                          gz_ref, gpv_ref,
                          *, beta, lamb, e_pos, e_neg):
    out = z_ref.shape[1]
    m_rows = gz_ref.shape[0]                # 3 * (e_pos + e_neg)
    e_tot = e_pos + e_neg

    # ---- z = X @ W + b (nn.Linear); stays resident in VMEM for everything below.
    z = jnp.dot(x_ref[...], lw_ref[...],
                preferred_element_type=jnp.float32) + lb_ref[...]          # (N, OUT)
    z_ref[...] = z

    # ---- Exact in-kernel row gather driven by the SMEM index table.
    #      gidx = concat(pos_i, pos_j, pos_k, neg_i, neg_j, neg_k): one dynamic
    #      (1, OUT) row copy per sampled node — no MXU, no one-hot selectors.
    for m in range(m_rows):                 # static trip count → unrolled at trace
        idx = gidx_ref[m]
        gz_ref[pl.ds(m, 1), :] = z_ref[pl.ds(idx, 1), :]
        gpv_ref[pl.ds(m, 1), :] = pv_ref[pl.ds(idx, 1), :]

    gz = gz_ref[...]                        # (M, OUT) gathered z rows
    gpv = gpv_ref[...]                      # (M, 1)   gathered prob_vi values

    ep, en = e_pos, e_neg
    z_pi, z_pj, z_pk = gz[0:ep], gz[ep:2 * ep], gz[2 * ep:3 * ep]
    o = 3 * ep
    z_ni, z_nj, z_nk = gz[o:o + en], gz[o + en:o + 2 * en], gz[o + 2 * en:o + 3 * en]

    # ---- loss1: regression loss (log_softmax + mean NLL).  Feature rows follow
    #      cat(pos, neg, surr_neg_i, surr_neg_j, surr_pos_i, surr_pos_j); the
    #      (M, 2*OUT) matrix is never built — split-K matmul on its halves.
    z_l = jnp.concatenate([z_pi, z_ni, z_ni, z_nj, z_pi, z_pj], axis=0)    # (M, OUT)
    z_r = jnp.concatenate([z_pj, z_nj, z_nk, z_nk, z_pk, z_pk], axis=0)    # (M, OUT)
    rw = rw_ref[...]                                                        # (2*OUT, 3)
    logits = (jnp.dot(z_l, rw[:out, :], preferred_element_type=jnp.float32)
              + jnp.dot(z_r, rw[out:, :], preferred_element_type=jnp.float32)
              + rb_ref[...])                                                # (M, 3)
    mx = jnp.max(logits, axis=1, keepdims=True)
    lse = mx + jnp.log(jnp.sum(jnp.exp(logits - mx), axis=1, keepdims=True))
    logp = logits - lse                                                     # log_softmax
    t1h = (lax.broadcasted_iota(jnp.int32, (m_rows, 3), 1)
           == tgt_ref[...]).astype(jnp.float32)                             # in-kernel one-hot
    loss1 = -jnp.sum(t1h * logp) * (1.0 / float(m_rows))                    # mean NLL

    # ---- loss2: MSE over (positive ++ negative) edges (SUM, as in the reference
    #      Python accumulation loop).  zi/zj are exactly z[i]/z[j] of the edges.
    zi = z_l[:e_tot, :]                     # pos_i ++ neg_i rows
    zj = z_r[:e_tot, :]                     # pos_j ++ neg_j rows
    dot_ij = jnp.sum(zi * zj, axis=1, keepdims=True)
    # torch.cosine_similarity eps: max(||v||, 1e-8) == sqrt(max(||v||^2, 1e-16))
    ssi = jnp.maximum(jnp.sum(zi * zi, axis=1, keepdims=True), 1e-16)
    ssj = jnp.maximum(jnp.sum(zj * zj, axis=1, keepdims=True), 1e-16)
    cos = dot_ij * lax.rsqrt(ssi) * lax.rsqrt(ssj)                          # EUP rsqrt

    p_i = jnp.concatenate([gpv[0:ep], gpv[o:o + en]], axis=0)               # prob_vi[i]
    p_j = jnp.concatenate([gpv[ep:2 * ep], gpv[o + en:o + 2 * en]], axis=0) # prob_vi[j]
    y_hat = beta * cos + (1.0 - beta) * 0.5 * (p_i + p_j)

    rows = lax.broadcasted_iota(jnp.int32, (e_tot, 1), 0)
    label = jnp.where(rows < ep, 1.0, 0.0)  # 1 for positive edges, 0 for negative
    loss2 = jnp.sum(0.5 * (label - y_hat) ** 2)

    loss_ref[0, 0] = loss1 + lamb * loss2


# ----------------------------------------------------------------------------
# Host-side glue (sampling + index table only; runs inside the same jit)
# ----------------------------------------------------------------------------
def structured_negative_sampling(key, edges, num_nodes):
    # i, j come from the edge list; k is a random node per edge.
    # TODO(synk): torch_geometric additionally rejects k colliding with an
    # existing edge (i, k); that rejection loop has no shape-static JAX/Pallas
    # equivalent, so k is a plain uniform draw here.
    i = edges[0].astype(jnp.int32)
    j = edges[1].astype(jnp.int32)
    k = jax.random.randint(key, (edges.shape[1],), 0, num_nodes, dtype=jnp.int32)
    return i, j, k


def lightsgcn_forward(params, args, X, positive_edges, negative_edges, target,
                      prob_vi, sampling_key):
    n, f_in = X.shape
    out = params["lin_w"].shape[1]
    e_pos = positive_edges.shape[1]
    e_neg = negative_edges.shape[1]
    m_rows = 3 * (e_pos + e_neg)

    kp, kn = jax.random.split(sampling_key)
    pi, pj, pk = structured_negative_sampling(kp, positive_edges, n)
    ni, nj, nk = structured_negative_sampling(kn, negative_edges, n)

    # One int32 gather table covering the 6 unique index blocks.  The kernel
    # assembles the full feature-row ordering from them without re-gathering.
    gidx = jnp.concatenate((pi, pj, pk, ni, nj, nk)).astype(jnp.int32)      # (M,)
    tgt_col = target.reshape(m_rows, 1).astype(jnp.int32)                   # (M, 1)
    pv_col = prob_vi.reshape(n, 1).astype(jnp.float32)                      # (N, 1)

    kernel = functools.partial(_fused_forward_kernel,
                               beta=float(args.beta), lamb=float(args.lamb),
                               e_pos=e_pos, e_neg=e_neg)

    grid_spec = pltpu.PrefetchScalarGridSpec(
        num_scalar_prefetch=1,                     # gidx lands in SMEM
        grid=(1,),
        in_specs=[
            pl.BlockSpec((n, f_in), lambda i, g: (0, 0)),        # X
            pl.BlockSpec((f_in, out), lambda i, g: (0, 0)),      # lin_w
            pl.BlockSpec((1, out), lambda i, g: (0, 0)),         # lin_b
            pl.BlockSpec((2 * out, 3), lambda i, g: (0, 0)),     # reg_w
            pl.BlockSpec((1, 3), lambda i, g: (0, 0)),           # reg_b
            pl.BlockSpec((m_rows, 1), lambda i, g: (0, 0)),      # target (int32)
            pl.BlockSpec((n, 1), lambda i, g: (0, 0)),           # prob_vi column
        ],
        out_specs=(
            pl.BlockSpec((n, out), lambda i, g: (0, 0)),             # z (VMEM)
            pl.BlockSpec(memory_space=pltpu.MemorySpace.SMEM),       # scalar loss
        ),
        scratch_shapes=[
            pltpu.VMEM((m_rows, out), jnp.float32),    # gathered z rows
            pltpu.VMEM((m_rows, 1), jnp.float32),      # gathered prob_vi values
        ],
    )

    z, loss = pl.pallas_call(
        kernel,
        out_shape=(jax.ShapeDtypeStruct((n, out), jnp.float32),
                   jax.ShapeDtypeStruct((1, 1), jnp.float32)),
        grid_spec=grid_spec,
        compiler_params=pltpu.CompilerParams(
            dimension_semantics=("arbitrary",)),
    )(gidx, X, params["lin_w"], params["lin_b"].reshape(1, out),
      params["reg_w"], params["reg_b"].reshape(1, 3), tgt_col, pv_col)

    return loss[0, 0], z


# ----------------------------------------------------------------------------
# Deterministic parameter init (matches the module's __init__ shapes)
# ----------------------------------------------------------------------------
def init_params(key, f_in, out_features):
    k1, k2, k3 = jax.random.split(key, 3)
    # nn.Linear default init: U(-1/sqrt(fan_in), 1/sqrt(fan_in))
    bound = 1.0 / jnp.sqrt(jnp.float32(f_in))
    lin_w = jax.random.uniform(k1, (f_in, out_features), jnp.float32, -bound, bound)
    lin_b = jax.random.uniform(k2, (out_features,), jnp.float32, -bound, bound)
    # regression_weights: xavier_normal_, shape (2*out_features, 3)
    fan_in, fan_out = 2 * out_features, 3
    std = jnp.sqrt(2.0 / (fan_in + fan_out))
    reg_w = std * jax.random.normal(k3, (2 * out_features, 3), jnp.float32)
    reg_b = jnp.zeros((3,), jnp.float32)  # regression_bias.data.fill_(0.0)
    return {"lin_w": lin_w, "lin_b": lin_b, "reg_w": reg_w, "reg_b": reg_b}


if __name__ == "__main__":
    # out_features is a multiple of 128 so the z store and the per-row VPU work
    # (norms, cosine, logits operands) are lane-dense (review item).
    args = SimpleNamespace(out_features=128, beta=0.6, lamb=0.1, seed=0)

    N_NODES, F_IN = 16, 64
    E_POS, E_NEG = 8, 8
    M = 3 * (E_POS + E_NEG)   # rows of the (never-materialized) feature matrix

    key = jax.random.PRNGKey(0)
    kx, ke_p, ke_n, kt, kp, kparam, ksamp = jax.random.split(key, 7)

    X = jax.random.normal(kx, (N_NODES, F_IN), jnp.float32)
    positive_edges = jax.random.randint(ke_p, (2, E_POS), 0, N_NODES, dtype=jnp.int32)
    negative_edges = jax.random.randint(ke_n, (2, E_NEG), 0, N_NODES, dtype=jnp.int32)
    target = jax.random.randint(kt, (M,), 0, 3, dtype=jnp.int32)
    prob_vi = jax.random.uniform(kp, (N_NODES,), jnp.float32)

    params = init_params(kparam, F_IN, args.out_features)

    # Sampling, index concat and the fused kernel all live in ONE jit
    # (the kernel is launch/DMA-latency bound; no extra host round-trips).
    fwd = jax.jit(lambda p, x, pe, ne, t, pv, k:
                  lightsgcn_forward(p, args, x, pe, ne, t, pv, k))

    loss, z = fwd(params, X, positive_edges, negative_edges, target, prob_vi, ksamp)
    jax.block_until_ready((loss, z))
    assert z.shape == (N_NODES, args.out_features)
    assert loss.shape == ()
    assert bool(jnp.isfinite(loss))
    print("KERNEL_OK")
</pallas_src>

<mosaic_0001>
module attributes {stable_mosaic.version = 11 : i64} {
  func.func @_fused_forward_kernel(%arg0: i32, %arg1: memref<48xi32, #tpu.memory_space<smem>>, %arg2: memref<16x64xf32, #tpu.memory_space<vmem>>, %arg3: memref<64x128xf32, #tpu.memory_space<vmem>>, %arg4: memref<1x128xf32, #tpu.memory_space<vmem>>, %arg5: memref<256x3xf32, #tpu.memory_space<vmem>>, %arg6: memref<1x3xf32, #tpu.memory_space<vmem>>, %arg7: memref<48x1xi32, #tpu.memory_space<vmem>>, %arg8: memref<16x1xf32, #tpu.memory_space<vmem>>, %arg9: memref<16x128xf32, #tpu.memory_space<vmem>>, %arg10: memref<1x1xf32, #tpu.memory_space<smem>>, %arg11: memref<48x128xf32, #tpu.memory_space<vmem>>, %arg12: memref<48x1xf32, #tpu.memory_space<vmem>>) attributes {dimension_semantics = [#tpu.dimension_semantics<arbitrary>], iteration_bounds = array<i64: 1>, scalar_prefetch = 1 : i64, scratch_operands = 2 : i64, tpu.core_type = #tpu.core_type<tc>, window_params = [{pipeline_mode = #tpu.pipeline_mode<synchronous>, transform_indices = @transform_0, window_bounds = array<i64: 16, 64>}, {pipeline_mode = #tpu.pipeline_mode<synchronous>, transform_indices = @transform_1, window_bounds = array<i64: 64, 128>}, {pipeline_mode = #tpu.pipeline_mode<synchronous>, transform_indices = @transform_2, window_bounds = array<i64: 1, 128>}, {pipeline_mode = #tpu.pipeline_mode<synchronous>, transform_indices = @transform_3, window_bounds = array<i64: 256, 3>}, {pipeline_mode = #tpu.pipeline_mode<synchronous>, transform_indices = @transform_4, window_bounds = array<i64: 1, 3>}, {pipeline_mode = #tpu.pipeline_mode<synchronous>, transform_indices = @transform_5, window_bounds = array<i64: 48, 1>}, {pipeline_mode = #tpu.pipeline_mode<synchronous>, transform_indices = @transform_6, window_bounds = array<i64: 16, 1>}, {pipeline_mode = #tpu.pipeline_mode<synchronous>, transform_indices = @transform_7, window_bounds = array<i64: 16, 128>}, {transform_indices = @transform_8, window_bounds = array<i64: 1, 1>}]} {
    %c0 = arith.constant 0 : index
    %c0_0 = arith.constant 0 : index
    %0 = vector.load %arg2[%c0, %c0_0] : memref<16x64xf32, #tpu.memory_space<vmem>>, vector<16x64xf32>
    %c0_1 = arith.constant 0 : index
    %c0_2 = arith.constant 0 : index
    %1 = vector.load %arg3[%c0_1, %c0_2] : memref<64x128xf32, #tpu.memory_space<vmem>>, vector<64x128xf32>
    %cst = arith.constant dense<0.000000e+00> : vector<16x128xf32>
    %2 = tpu.matmul %0, %1, %cst {dimension_numbers = #tpu.dot_dimension_numbers<[1], [0], [0], [1], [0, 0, 1, 1], [], []>} : vector<16x64xf32>, vector<64x128xf32>, vector<16x128xf32> -> vector<16x128xf32>
    %c0_3 = arith.constant 0 : index
    %c0_4 = arith.constant 0 : index
    %3 = vector.load %arg4[%c0_3, %c0_4] : memref<1x128xf32, #tpu.memory_space<vmem>>, vector<1x128xf32>
    %4 = vector.broadcast %3 : vector<1x128xf32> to vector<16x128xf32>
    %5 = arith.addf %2, %4 : vector<16x128xf32>
    %c0_5 = arith.constant 0 : index
    %c0_6 = arith.constant 0 : index
    %6 = vector.load %arg9[%c0_5, %c0_6] : memref<16x128xf32, #tpu.memory_space<vmem>>, vector<16x128xf32>
    tpu.vector_store %arg9[%c0_5, %c0_6], %5 {strides = array<i32>} : memref<16x128xf32, #tpu.memory_space<vmem>>, vector<16x128xf32>,
    %c0_7 = arith.constant 0 : index
    %7 = memref.load %arg1[%c0_7] : memref<48xi32, #tpu.memory_space<smem>>
    %8 = arith.index_cast %7 : i32 to index
    %c0_8 = arith.constant 0 : index
    %9 = vector.load %arg9[%8, %c0_8] : memref<16x128xf32, #tpu.memory_space<vmem>>, vector<1x128xf32>
    %c0_9 = arith.constant 0 : index
    %c0_10 = arith.constant 0 : index
    %10 = vector.load %arg11[%c0_9, %c0_10] : memref<48x128xf32, #tpu.memory_space<vmem>>, vector<1x128xf32>
    tpu.vector_store %arg11[%c0_9, %c0_10], %9 {strides = array<i32>} : memref<48x128xf32, #tpu.memory_space<vmem>>, vector<1x128xf32>,
    %11 = arith.index_cast %7 : i32 to index
    %c0_11 = arith.constant 0 : index
    %12 = vector.load %arg8[%11, %c0_11] : memref<16x1xf32, #tpu.memory_space<vmem>>, vector<1x1xf32>
    %c0_12 = arith.constant 0 : index
    %c0_13 = arith.constant 0 : index
    %13 = vector.load %arg12[%c0_12, %c0_13] : memref<48x1xf32, #tpu.memory_space<vmem>>, vector<1x1xf32>
    tpu.vector_store %arg12[%c0_12, %c0_13], %12 {strides = array<i32>} : memref<48x1xf32, #tpu.memory_space<vmem>>, vector<1x1xf32>,
    %c1 = arith.constant 1 : index
    %14 = memref.load %arg1[%c1] : memref<48xi32, #tpu.memory_space<smem>>
    %15 = arith.index_cast %14 : i32 to index
    %c0_14 = arith.constant 0 : index
    %16 = vector.load %arg9[%15, %c0_14] : memref<16x128xf32, #tpu.memory_space<vmem>>, vector<1x128xf32>
    %c1_15 = arith.constant 1 : index
    %c0_16 = arith.constant 0 : index
    %17 = vector.load %arg11[%c1_15, %c0_16] : memref<48x128xf32, #tpu.memory_space<vmem>>, vector<1x128xf32>
    tpu.vector_store %arg11[%c1_15, %c0_16], %16 {strides = array<i32>} : memref<48x128xf32, #tpu.memory_space<vmem>>, vector<1x128xf32>,
    %18 = arith.index_cast %14 : i32 to index
    %c0_17 = arith.constant 0 : index
    %19 = vector.load %arg8[%18, %c0_17] : memref<16x1xf32, #tpu.memory_space<vmem>>, vector<1x1xf32>
    %c1_18 = arith.constant 1 : index
    %c0_19 = arith.constant 0 : index
    %20 = vector.load %arg12[%c1_18, %c0_19] : memref<48x1xf32, #tpu.memory_space<vmem>>, vector<1x1xf32>
    tpu.vector_store %arg12[%c1_18, %c0_19], %19 {strides = array<i32>} : memref<48x1xf32, #tpu.memory_space<vmem>>, vector<1x1xf32>,
    %c2 = arith.constant 2 : index
    %21 = memref.load %arg1[%c2] : memref<48xi32, #tpu.memory_space<smem>>
    %22 = arith.index_cast %21 : i32 to index
    %c0_20 = arith.constant 0 : index
    %23 = vector.load %arg9[%22, %c0_20] : memref<16x128xf32, #tpu.memory_space<vmem>>, vector<1x128xf32>
    %c2_21 = arith.constant 2 : index
    %c0_22 = arith.constant 0 : index
    %24 = vector.load %arg11[%c2_21, %c0_22] : memref<48x128xf32, #tpu.memory_space<vmem>>, vector<1x128xf32>
    tpu.vector_store %arg11[%c2_21, %c0_22], %23 {strides = array<i32>} : memref<48x128xf32, #tpu.memory_space<vmem>>, vector<1x128xf32>,
    %25 = arith.index_cast %21 : i32 to index
    %c0_23 = arith.constant 0 : index
    %26 = vector.load %arg8[%25, %c0_23] : memref<16x1xf32, #tpu.memory_space<vmem>>, vector<1x1xf32>
    %c2_24 = arith.constant 2 : index
    %c0_25 = arith.constant 0 : index
    %27 = vector.load %arg12[%c2_24, %c0_25] : memref<48x1xf32, #tpu.memory_space<vmem>>, vector<1x1xf32>
    tpu.vector_store %arg12[%c2_24, %c0_25], %26 {strides = array<i32>} : memref<48x1xf32, #tpu.memory_space<vmem>>, vector<1x1xf32>,
    %c3 = arith.constant 3 : index
    %28 = memref.load %arg1[%c3] : memref<48xi32, #tpu.memory_space<smem>>
    %29 = arith.index_cast %28 : i32 to index
    %c0_26 = arith.constant 0 : index
    %30 = vector.load %arg9[%29, %c0_26] : memref<16x128xf32, #tpu.memory_space<vmem>>, vector<1x128xf32>
    %c3_27 = arith.constant 3 : index
    %c0_28 = arith.constant 0 : index
    %31 = vector.load %arg11[%c3_27, %c0_28] : memref<48x128xf32, #tpu.memory_space<vmem>>, vector<1x128xf32>
    tpu.vector_store %arg11[%c3_27, %c0_28], %30 {strides = array<i32>} : memref<48x128xf32, #tpu.memory_space<vmem>>, vector<1x128xf32>,
    %32 = arith.index_cast %28 : i32 to index
    %c0_29 = arith.constant 0 : index
    %33 = vector.load %arg8[%32, %c0_29] : memref<16x1xf32, #tpu.memory_space<vmem>>, vector<1x1xf32>
    %c3_30 = arith.constant 3 : index
    %c0_31 = arith.constant 0 : index
    %34 = vector.load %arg12[%c3_30, %c0_31] : memref<48x1xf32, #tpu.memory_space<vmem>>, vector<1x1xf32>
    tpu.vector_store %arg12[%c3_30, %c0_31], %33 {strides = array<i32>} : memref<48x1xf32, #tpu.memory_space<vmem>>, vector<1x1xf32>,
    %c4 = arith.constant 4 : index
    %35 = memref.load %arg1[%c4] : memref<48xi32, #tpu.memory_space<smem>>
    %36 = arith.index_cast %35 : i32 to index
    %c0_32 = arith.constant 0 : index
    %37 = vector.load %arg9[%36, %c0_32] : memref<16x128xf32, #tpu.memory_space<vmem>>, vector<1x128xf32>
    %c4_33 = arith.constant 4 : index
    %c0_34 = arith.constant 0 : index
    %38 = vector.load %arg11[%c4_33, %c0_34] : memref<48x128xf32, #tpu.memory_space<vmem>>, vector<1x128xf32>
    tpu.vector_store %arg11[%c4_33, %c0_34], %37 {strides = array<i32>} : memref<48x128xf32, #tpu.memory_space<vmem>>, vector<1x128xf32>,
    %39 = arith.index_cast %35 : i32 to index
    %c0_35 = arith.constant 0 : index
    %40 = vector.load %arg8[%39, %c0_35] : memref<16x1xf32, #tpu.memory_space<vmem>>, vector<1x1xf32>
    %c4_36 = arith.constant 4 : index
    %c0_37 = arith.constant 0 : index
    %41 = vector.load %arg12[%c4_36, %c0_37] : memref<48x1xf32, #tpu.memory_space<vmem>>, vector<1x1xf32>
    tpu.vector_store %arg12[%c4_36, %c0_37], %40 {strides = array<i32>} : memref<48x1xf32, #tpu.memory_space<vmem>>, vector<1x1xf32>,
    %c5 = arith.constant 5 : index
    %42 = memref.load %arg1[%c5] : memref<48xi32, #tpu.memory_space<smem>>
    %43 = arith.index_cast %42 : i32 to index
    %c0_38 = arith.constant 0 : index
    %44 = vector.load %arg9[%43, %c0_38] : memref<16x128xf32, #tpu.memory_space<vmem>>, vector<1x128xf32>
    %c5_39 = arith.constant 5 : index
    %c0_40 = arith.constant 0 : index
    %45 = vector.load %arg11[%c5_39, %c0_40] : memref<48x128xf32, #tpu.memory_space<vmem>>, vector<1x128xf32>
    tpu.vector_store %arg11[%c5_39, %c0_40], %44 {strides = array<i32>} : memref<48x128xf32, #tpu.memory_space<vmem>>, vector<1x128xf32>,
    %46 = arith.index_cast %42 : i32 to index
    %c0_41 = arith.constant 0 : index
    %47 = vector.load %arg8[%46, %c0_41] : memref<16x1xf32, #tpu.memory_space<vmem>>, vector<1x1xf32>
    %c5_42 = arith.constant 5 : index
    %c0_43 = arith.constant 0 : index
    %48 = vector.load %arg12[%c5_42, %c0_43] : memref<48x1xf32, #tpu.memory_space<vmem>>, vector<1x1xf32>
    tpu.vector_store %arg12[%c5_42, %c0_43], %47 {strides = array<i32>} : memref<48x1xf32, #tpu.memory_space<vmem>>, vector<1x1xf32>,
    %c6 = arith.constant 6 : index
    %49 = memref.load %arg1[%c6] : memref<48xi32, #tpu.memory_space<smem>>
    %50 = arith.index_cast %49 : i32 to index
    %c0_44 = arith.constant 0 : index
    %51 = vector.load %arg9[%50, %c0_44] : memref<16x128xf32, #tpu.memory_space<vmem>>, vector<1x128xf32>
    %c6_45 = arith.constant 6 : index
    %c0_46 = arith.constant 0 : index
    %52 = vector.load %arg11[%c6_45, %c0_46] : memref<48x128xf32, #tpu.memory_space<vmem>>, vector<1x128xf32>
    tpu.vector_store %arg11[%c6_45, %c0_46], %51 {strides = array<i32>} : memref<48x128xf32, #tpu.memory_space<vmem>>, vector<1x128xf32>,
    %53 = arith.index_cast %49 : i32 to index
    %c0_47 = arith.constant 0 : index
    %54 = vector.load %arg8[%53, %c0_47] : memref<16x1xf32, #tpu.memory_space<vmem>>, vector<1x1xf32>
    %c6_48 = arith.constant 6 : index
    %c0_49 = arith.constant 0 : index
    %55 = vector.load %arg12[%c6_48, %c0_49] : memref<48x1xf32, #tpu.memory_space<vmem>>, vector<1x1xf32>
    tpu.vector_store %arg12[%c6_48, %c0_49], %54 {strides = array<i32>} : memref<48x1xf32, #tpu.memory_space<vmem>>, vector<1x1xf32>,
    %c7 = arith.constant 7 : index
    %56 = memref.load %arg1[%c7] : memref<48xi32, #tpu.memory_space<smem>>
    %57 = arith.index_cast %56 : i32 to index
    %c0_50 = arith.constant 0 : index
    %58 = vector.load %arg9[%57, %c0_50] : memref<16x128xf32, #tpu.memory_space<vmem>>, vector<1x128xf32>
    %c7_51 = arith.constant 7 : index
    %c0_52 = arith.constant 0 : index
    %59 = vector.load %arg11[%c7_51, %c0_52] : memref<48x128xf32, #tpu.memory_space<vmem>>, vector<1x128xf32>
    tpu.vector_store %arg11[%c7_51, %c0_52], %58 {strides = array<i32>} : memref<48x128xf32, #tpu.memory_space<vmem>>, vector<1x128xf32>,
    %60 = arith.index_cast %56 : i32 to index
    %c0_53 = arith.constant 0 : index
    %61 = vector.load %arg8[%60, %c0_53] : memref<16x1xf32, #tpu.memory_space<vmem>>, vector<1x1xf32>
    %c7_54 = arith.constant 7 : index
    %c0_55 = arith.constant 0 : index
    %62 = vector.load %arg12[%c7_54, %c0_55] : memref<48x1xf32, #tpu.memory_space<vmem>>, vector<1x1xf32>
    tpu.vector_store %arg12[%c7_54, %c0_55], %61 {strides = array<i32>} : memref<48x1xf32, #tpu.memory_space<vmem>>, vector<1x1xf32>,
    %c8 = arith.constant 8 : index
    %63 = memref.load %arg1[%c8] : memref<48xi32, #tpu.memory_space<smem>>
    %64 = arith.index_cast %63 : i32 to index
    %c0_56 = arith.constant 0 : index
    %65 = vector.load %arg9[%64, %c0_56] : memref<16x128xf32, #tpu.memory_space<vmem>>, vector<1x128xf32>
    %c8_57 = arith.constant 8 : index
    %c0_58 = arith.constant 0 : index
    %66 = vector.load %arg11[%c8_57, %c0_58] : memref<48x128xf32, #tpu.memory_space<vmem>>, vector<1x128xf32>
    tpu.vector_store %arg11[%c8_57, %c0_58], %65 {strides = array<i32>} : memref<48x128xf32, #tpu.memory_space<vmem>>, vector<1x128xf32>,
    %67 = arith.index_cast %63 : i32 to index
    %c0_59 = arith.constant 0 : index
    %68 = vector.load %arg8[%67, %c0_59] : memref<16x1xf32, #tpu.memory_space<vmem>>, vector<1x1xf32>
    %c8_60 = arith.constant 8 : index
    %c0_61 = arith.constant 0 : index
    %69 = vector.load %arg12[%c8_60, %c0_61] : memref<48x1xf32, #tpu.memory_space<vmem>>, vector<1x1xf32>
    tpu.vector_store %arg12[%c8_60, %c0_61], %68 {strides = array<i32>} : memref<48x1xf32, #tpu.memory_space<vmem>>, vector<1x1xf32>,
    %c9 = arith.constant 9 : index
    %70 = memref.load %arg1[%c9] : memref<48xi32, #tpu.memory_space<smem>>
    %71 = arith.index_cast %70 : i32 to index
    %c0_62 = arith.constant 0 : index
    %72 = vector.load %arg9[%71, %c0_62] : memref<16x128xf32, #tpu.memory_space<vmem>>, vector<1x128xf32>
    %c9_63 = arith.constant 9 : index
    %c0_64 = arith.constant 0 : index
    %73 = vector.load %arg11[%c9_63, %c0_64] : memref<48x128xf32, #tpu.memory_space<vmem>>, vector<1x128xf32>
    tpu.vector_store %arg11[%c9_63, %c0_64], %72 {strides = array<i32>} : memref<48x128xf32, #tpu.memory_space<vmem>>, vector<1x128xf32>,
    %74 = arith.index_cast %70 : i32 to index
    %c0_65 = arith.constant 0 : index
    %75 = vector.load %arg8[%74, %c0_65] : memref<16x1xf32, #tpu.memory_space<vmem>>, vector<1x1xf32>
    %c9_66 = arith.constant 9 : index
    %c0_67 = arith.constant 0 : index
    %76 = vector.load %arg12[%c9_66, %c0_67] : memref<48x1xf32, #tpu.memory_space<vmem>>, vector<1x1xf32>
    tpu.vector_store %arg12[%c9_66, %c0_67], %75 {strides = array<i32>} : memref<48x1xf32, #tpu.memory_space<vmem>>, vector<1x1xf32>,
    %c10 = arith.constant 10 : index
    %77 = memref.load %arg1[%c10] : memref<48xi32, #tpu.memory_space<smem>>
    %78 = arith.index_cast %77 : i32 to index
    %c0_68 = arith.constant 0 : index
    %79 = vector.load %arg9[%78, %c0_68] : memref<16x128xf32, #tpu.memory_space<vmem>>, vector<1x128xf32>
    %c10_69 = arith.constant 10 : index
    %c0_70 = arith.constant 0 : index
    %80 = vector.load %arg11[%c10_69, %c0_70] : memref<48x128xf32, #tpu.memory_space<vmem>>, vector<1x128xf32>
    tpu.vector_store %arg11[%c10_69, %c0_70], %79 {strides = array<i32>} : memref<48x128xf32, #tpu.memory_space<vmem>>, vector<1x128xf32>,
    %81 = arith.index_cast %77 : i32 to index
    %c0_71 = arith.constant 0 : index
    %82 = vector.load %arg8[%81, %c0_71] : memref<16x1xf32, #tpu.memory_space<vmem>>, vector<1x1xf32>
    %c10_72 = arith.constant 10 : index
    %c0_73 = arith.constant 0 : index
    %83 = vector.load %arg12[%c10_72, %c0_73] : memref<48x1xf32, #tpu.memory_space<vmem>>, vector<1x1xf32>
    tpu.vector_store %arg12[%c10_72, %c0_73], %82 {strides = array<i32>} : memref<48x1xf32, #tpu.memory_space<vmem>>, vector<1x1xf32>,
    %c11 = arith.constant 11 : index
    %84 = memref.load %arg1[%c11] : memref<48xi32, #tpu.memory_space<smem>>
    %85 = arith.index_cast %84 : i32 to index
    %c0_74 = arith.constant 0 : index
    %86 = vector.load %arg9[%85, %c0_74] : memref<16x128xf32, #tpu.memory_space<vmem>>, vector<1x128xf32>
    %c11_75 = arith.constant 11 : index
    %c0_76 = arith.constant 0 : index
    %87 = vector.load %arg11[%c11_75, %c0_76] : memref<48x128xf32, #tpu.memory_space<vmem>>, vector<1x128xf32>
    tpu.vector_store %arg11[%c11_75, %c0_76], %86 {strides = array<i32>} : memref<48x128xf32, #tpu.memory_space<vmem>>, vector<1x128xf32>,
    %88 = arith.index_cast %84 : i32 to index
    %c0_77 = arith.constant 0 : index
    %89 = vector.load %arg8[%88, %c0_77] : memref<16x1xf32, #tpu.memory_space<vmem>>, vector<1x1xf32>
    %c11_78 = arith.constant 11 : index
    %c0_79 = arith.constant 0 : index
    %90 = vector.load %arg12[%c11_78, %c0_79] : memref<48x1xf32, #tpu.memory_space<vmem>>, vector<1x1xf32>
    tpu.vector_store %arg12[%c11_78, %c0_79], %89 {strides = array<i32>} : memref<48x1xf32, #tpu.memory_space<vmem>>, vector<1x1xf32>,
    %c12 = arith.constant 12 : index
    %91 = memref.load %arg1[%c12] : memref<48xi32, #tpu.memory_space<smem>>
    %92 = arith.index_cast %91 : i32 to index
    %c0_80 = arith.constant 0 : index
    %93 = vector.load %arg9[%92, %c0_80] : memref<16x128xf32, #tpu.memory_space<vmem>>, vector<1x128xf32>
    %c12_81 = arith.constant 12 : index
    %c0_82 = arith.constant 0 : index
    %94 = vector.load %arg11[%c12_81, %c0_82] : memref<48x128xf32, #tpu.memory_space<vmem>>, vector<1x128xf32>
    tpu.vector_store %arg11[%c12_81, %c0_82], %93 {strides = array<i32>} : memref<48x128xf32, #tpu.memory_space<vmem>>, vector<1x128xf32>,
    %95 = arith.index_cast %91 : i32 to index
    %c0_83 = arith.constant 0 : index
    %96 = vector.load %arg8[%95, %c0_83] : memref<16x1xf32, #tpu.memory_space<vmem>>, vector<1x1xf32>
    %c12_84 = arith.constant 12 : index
    %c0_85 = arith.constant 0 : index
    %97 = vector.load %arg12[%c12_84, %c0_85] : memref<48x1xf32, #tpu.memory_space<vmem>>, vector<1x1xf32>
    tpu.vector_store %arg12[%c12_84, %c0_85], %96 {strides = array<i32>} : memref<48x1xf32, #tpu.memory_space<vmem>>, vector<1x1xf32>,
    %c13 = arith.constant 13 : index
    %98 = memref.load %arg1[%c13] : memref<48xi32, #tpu.memory_space<smem>>
    %99 = arith.index_cast %98 : i32 to index
    %c0_86 = arith.constant 0 : index
    %100 = vector.load %arg9[%99, %c0_86] : memref<16x128xf32, #tpu.memory_space<vmem>>, vector<1x128xf32>
    %c13_87 = arith.constant 13 : index
    %c0_88 = arith.constant 0 : index
    %101 = vector.load %arg11[%c13_87, %c0_88] : memref<48x128xf32, #tpu.memory_space<vmem>>, vector<1x128xf32>
    tpu.vector_store %arg11[%c13_87, %c0_88], %100 {strides = array<i32>} : memref<48x128xf32, #tpu.memory_space<vmem>>, vector<1x128xf32>,
    %102 = arith.index_cast %98 : i32 to index
    %c0_89 = arith.constant 0 : index
    %103 = vector.load %arg8[%102, %c0_89] : memref<16x1xf32, #tpu.memory_space<vmem>>, vector<1x1xf32>
    %c13_90 = arith.constant 13 : index
    %c0_91 = arith.constant 0 : index
    %104 = vector.load %arg12[%c13_90, %c0_91] : memref<48x1xf32, #tpu.memory_space<vmem>>, vector<1x1xf32>
    tpu.vector_store %arg12[%c13_90, %c0_91], %103 {strides = array<i32>} : memref<48x1xf32, #tpu.memory_space<vmem>>, vector<1x1xf32>,
    %c14 = arith.constant 14 : index
    %105 = memref.load %arg1[%c14] : memref<48xi32, #tpu.memory_space<smem>>
    %106 = arith.index_cast %105 : i32 to index
    %c0_92 = arith.constant 0 : index
    %107 = vector.load %arg9[%106, %c0_92] : memref<16x128xf32, #tpu.memory_space<vmem>>, vector<1x128xf32>
    %c14_93 = arith.constant 14 : index
    %c0_94 = arith.constant 0 : index
    %108 = vector.load %arg11[%c14_93, %c0_94] : memref<48x128xf32, #tpu.memory_space<vmem>>, vector<1x128xf32>
    tpu.vector_store %arg11[%c14_93, %c0_94], %107 {strides = array<i32>} : memref<48x128xf32, #tpu.memory_space<vmem>>, vector<1x128xf32>,
    %109 = arith.index_cast %105 : i32 to index
    %c0_95 = arith.constant 0 : index
    %110 = vector.load %arg8[%109, %c0_95] : memref<16x1xf32, #tpu.memory_space<vmem>>, vector<1x1xf32>
    %c14_96 = arith.constant 14 : index
    %c0_97 = arith.constant 0 : index
    %111 = vector.load %arg12[%c14_96, %c0_97] : memref<48x1xf32, #tpu.memory_space<vmem>>, vector<1x1xf32>
    tpu.vector_store %arg12[%c14_96, %c0_97], %110 {strides = array<i32>} : memref<48x1xf32, #tpu.memory_space<vmem>>, vector<1x1xf32>,
    %c15 = arith.constant 15 : index
    %112 = memref.load %arg1[%c15] : memref<48xi32, #tpu.memory_space<smem>>
    %113 = arith.index_cast %112 : i32 to index
    %c0_98 = arith.constant 0 : index
    %114 = vector.load %arg9[%113, %c0_98] : memref<16x128xf32, #tpu.memory_space<vmem>>, vector<1x128xf32>
    %c15_99 = arith.constant 15 : index
    %c0_100 = arith.constant 0 : index
    %115 = vector.load %arg11[%c15_99, %c0_100] : memref<48x128xf32, #tpu.memory_space<vmem>>, vector<1x128xf32>
    tpu.vector_store %arg11[%c15_99, %c0_100], %114 {strides = array<i32>} : memref<48x128xf32, #tpu.memory_space<vmem>>, vector<1x128xf32>,
    %116 = arith.index_cast %112 : i32 to index
    %c0_101 = arith.constant 0 : index
    %117 = vector.load %arg8[%116, %c0_101] : memref<16x1xf32, #tpu.memory_space<vmem>>, vector<1x1xf32>
    %c15_102 = arith.constant 15 : index
    %c0_103 = arith.constant 0 : index
    %118 = vector.load %arg12[%c15_102, %c0_103] : memref<48x1xf32, #tpu.memory_space<vmem>>, vector<1x1xf32>
    tpu.vector_store %arg12[%c15_102, %c0_103], %117 {strides = array<i32>} : memref<48x1xf32, #tpu.memory_space<vmem>>, vector<1x1xf32>,
    %c16 = arith.constant 16 : index
    %119 = memref.load %arg1[%c16] : memref<48xi32, #tpu.memory_space<smem>>
    %120 = arith.index_cast %119 : i32 to index
    %c0_104 = arith.constant 0 : index
    %121 = vector.load %arg9[%120, %c0_104] : memref<16x128xf32, #tpu.memory_space<vmem>>, vector<1x128xf32>
    %c16_105 = arith.constant 16 : index
    %c0_106 = arith.constant 0 : index
    %122 = vector.load %arg11[%c16_105, %c0_106] : memref<48x128xf32, #tpu.memory_space<vmem>>, vector<1x128xf32>
    tpu.vector_store %arg11[%c16_105, %c0_106], %121 {strides = array<i32>} : memref<48x128xf32, #tpu.memory_space<vmem>>, vector<1x128xf32>,
    %123 = arith.index_cast %119 : i32 to index
    %c0_107 = arith.constant 0 : index
    %124 = vector.load %arg8[%123, %c0_107] : memref<16x1xf32, #tpu.memory_space<vmem>>, vector<1x1xf32>
    %c16_108 = arith.constant 16 : index
    %c0_109 = arith.constant 0 : index
    %125 = vector.load %arg12[%c16_108, %c0_109] : memref<48x1xf32, #tpu.memory_space<vmem>>, vector<1x1xf32>
    tpu.vector_store %arg12[%c16_108, %c0_109], %124 {strides = array<i32>} : memref<48x1xf32, #tpu.memory_space<vmem>>, vector<1x1xf32>,
    %c17 = arith.constant 17 : index
    %126 = memref.load %arg1[%c17] : memref<48xi32, #tpu.memory_space<smem>>
    %127 = arith.index_cast %126 : i32 to index
    %c0_110 = arith.constant 0 : index
    %128 = vector.load %arg9[%127, %c0_110] : memref<16x128xf32, #tpu.memory_space<vmem>>, vector<1x128xf32>
    %c17_111 = arith.constant 17 : index
    %c0_112 = arith.constant 0 : index
    %129 = vector.load %arg11[%c17_111, %c0_112] : memref<48x128xf32, #tpu.memory_space<vmem>>, vector<1x128xf32>
    tpu.vector_store %arg11[%c17_111, %c0_112], %128 {strides = array<i32>} : memref<48x128xf32, #tpu.memory_space<vmem>>, vector<1x128xf32>,
    %130 = arith.index_cast %126 : i32 to index
    %c0_113 = arith.constant 0 : index
    %131 = vector.load %arg8[%130, %c0_113] : memref<16x1xf32, #tpu.memory_space<vmem>>, vector<1x1xf32>
    %c17_114 = arith.constant 17 : index
    %c0_115 = arith.constant 0 : index
    %132 = vector.load %arg12[%c17_114, %c0_115] : memref<48x1xf32, #tpu.memory_space<vmem>>, vector<1x1xf32>
    tpu.vector_store %arg12[%c17_114, %c0_115], %131 {strides = array<i32>} : memref<48x1xf32, #tpu.memory_space<vmem>>, vector<1x1xf32>,
    %c18 = arith.constant 18 : index
    %133 = memref.load %arg1[%c18] : memref<48xi32, #tpu.memory_space<smem>>
    %134 = arith.index_cast %133 : i32 to index
    %c0_116 = arith.constant 0 : index
    %135 = vector.load %arg9[%134, %c0_116] : memref<16x128xf32, #tpu.memory_space<vmem>>, vector<1x128xf32>
    %c18_117 = arith.constant 18 : index
    %c0_118 = arith.constant 0 : index
    %136 = vector.load %arg11[%c18_117, %c0_118] : memref<48x128xf32, #tpu.memory_space<vmem>>, vector<1x128xf32>
    tpu.vector_store %arg11[%c18_117, %c0_118], %135 {strides = array<i32>} : memref<48x128xf32, #tpu.memory_space<vmem>>, vector<1x128xf32>,
    %137 = arith.index_cast %133 : i32 to index
    %c0_119 = arith.constant 0 : index
    %138 = vector.load %arg8[%137, %c0_119] : memref<16x1xf32, #tpu.memory_space<vmem>>, vector<1x1xf32>
    %c18_120 = arith.constant 18 : index
    %c0_121 = arith.constant 0 : index
    %139 = vector.load %arg12[%c18_120, %c0_121] : memref<48x1xf32, #tpu.memory_space<vmem>>, vector<1x1xf32>
    tpu.vector_store %arg12[%c18_120, %c0_121], %138 {strides = array<i32>} : memref<48x1xf32, #tpu.memory_space<vmem>>, vector<1x1xf32>,
    %c19 = arith.constant 19 : index
    %140 = memref.load %arg1[%c19] : memref<48xi32, #tpu.memory_space<smem>>
    %141 = arith.index_cast %140 : i32 to index
    %c0_122 = arith.constant 0 : index
    %142 = vector.load %arg9[%141, %c0_122] : memref<16x128xf32, #tpu.memory_space<vmem>>, vector<1x128xf32>
    %c19_123 = arith.constant 19 : index
    %c0_124 = arith.constant 0 : index
    %143 = vector.load %arg11[%c19_123, %c0_124] : memref<48x128xf32, #tpu.memory_space<vmem>>, vector<1x128xf32>
    tpu.vector_store %arg11[%c19_123, %c0_124], %142 {strides = array<i32>} : memref<48x128xf32, #tpu.memory_space<vmem>>, vector<1x128xf32>,
    %144 = arith.index_cast %140 : i32 to index
    %c0_125 = arith.constant 0 : index
    %145 = vector.load %arg8[%144, %c0_125] : memref<16x1xf32, #tpu.memory_space<vmem>>, vector<1x1xf32>
    %c19_126 = arith.constant 19 : index
    %c0_127 = arith.constant 0 : index
    %146 = vector.load %arg12[%c19_126, %c0_127] : memref<48x1xf32, #tpu.memory_space<vmem>>, vector<1x1xf32>
    tpu.vector_store %arg12[%c19_126, %c0_127], %145 {strides = array<i32>} : memref<48x1xf32, #tpu.memory_space<vmem>>, vector<1x1xf32>,
    %c20 = arith.constant 20 : index
    %147 = memref.load %arg1[%c20] : memref<48xi32, #tpu.memory_space<smem>>
    %148 = arith.index_cast %147 : i32 to index
    %c0_128 = arith.constant 0 : index
    %149 = vector.load %arg9[%148, %c0_128] : memref<16x128xf32, #tpu.memory_space<vmem>>, vector<1x128xf32>
    %c20_129 = arith.constant 20 : index
    %c0_130 = arith.constant 0 : index
    %150 = vector.load %arg11[%c20_129, %c0_130] : memref<48x128xf32, #tpu.memory_space<vmem>>, vector<1x128xf32>
    tpu.vector_store %arg11[%c20_129, %c0_130], %149 {strides = array<i32>} : memref<48x128xf32, #tpu.memory_space<vmem>>, vector<1x128xf32>,
    %151 = arith.index_cast %147 : i32 to index
    %c0_131 = arith.constant 0 : index
    %152 = vector.load %arg8[%151, %c0_131] : memref<16x1xf32, #tpu.memory_space<vmem>>, vector<1x1xf32>
    %c20_132 = arith.constant 20 : index
    %c0_133 = arith.constant 0 : index
    %153 = vector.load %arg12[%c20_132, %c0_133] : memref<48x1xf32, #tpu.memory_space<vmem>>, vector<1x1xf32>
    tpu.vector_store %arg12[%c20_132, %c0_133], %152 {strides = array<i32>} : memref<48x1xf32, #tpu.memory_space<vmem>>, vector<1x1xf32>,
    %c21 = arith.constant 21 : index
    %154 = memref.load %arg1[%c21] : memref<48xi32, #tpu.memory_space<smem>>
    %155 = arith.index_cast %154 : i32 to index
    %c0_134 = arith.constant 0 : index
    %156 = vector.load %arg9[%155, %c0_134] : memref<16x128xf32, #tpu.memory_space<vmem>>, vector<1x128xf32>
    %c21_135 = arith.constant 21 : index
    %c0_136 = arith.constant 0 : index
    %157 = vector.load %arg11[%c21_135, %c0_136] : memref<48x128xf32, #tpu.memory_space<vmem>>, vector<1x128xf32>
    tpu.vector_store %arg11[%c21_135, %c0_136], %156 {strides = array<i32>} : memref<48x128xf32, #tpu.memory_space<vmem>>, vector<1x128xf32>,
    %158 = arith.index_cast %154 : i32 to index
    %c0_137 = arith.constant 0 : index
    %159 = vector.load %arg8[%158, %c0_137] : memref<16x1xf32, #tpu.memory_space<vmem>>, vector<1x1xf32>
    %c21_138 = arith.constant 21 : index
    %c0_139 = arith.constant 0 : index
    %160 = vector.load %arg12[%c21_138, %c0_139] : memref<48x1xf32, #tpu.memory_space<vmem>>, vector<1x1xf32>
    tpu.vector_store %arg12[%c21_138, %c0_139], %159 {strides = array<i32>} : memref<48x1xf32, #tpu.memory_space<vmem>>, vector<1x1xf32>,
    %c22 = arith.constant 22 : index
    %161 = memref.load %arg1[%c22] : memref<48xi32, #tpu.memory_space<smem>>
    %162 = arith.index_cast %161 : i32 to index
    %c0_140 = arith.constant 0 : index
    %163 = vector.load %arg9[%162, %c0_140] : memref<16x128xf32, #tpu.memory_space<vmem>>, vector<1x128xf32>
    %c22_141 = arith.constant 22 : index
    %c0_142 = arith.constant 0 : index
    %164 = vector.load %arg11[%c22_141, %c0_142] : memref<48x128xf32, #tpu.memory_space<vmem>>, vector<1x128xf32>
    tpu.vector_store %arg11[%c22_141, %c0_142], %163 {strides = array<i32>} : memref<48x128xf32, #tpu.memory_space<vmem>>, vector<1x128xf32>,
    %165 = arith.index_cast %161 : i32 to index
    %c0_143 = arith.constant 0 : index
    %166 = vector.load %arg8[%165, %c0_143] : memref<16x1xf32, #tpu.memory_space<vmem>>, vector<1x1xf32>
    %c22_144 = arith.constant 22 : index
    %c0_145 = arith.constant 0 : index
    %167 = vector.load %arg12[%c22_144, %c0_145] : memref<48x1xf32, #tpu.memory_space<vmem>>, vector<1x1xf32>
    tpu.vector_store %arg12[%c22_144, %c0_145], %166 {strides = array<i32>} : memref<48x1xf32, #tpu.memory_space<vmem>>, vector<1x1xf32>,
    %c23 = arith.constant 23 : index
    %168 = memref.load %arg1[%c23] : memref<48xi32, #tpu.memory_space<smem>>
    %169 = arith.index_cast %168 : i32 to index
    %c0_146 = arith.constant 0 : index
    %170 = vector.load %arg9[%169, %c0_146] : memref<16x128xf32, #tpu.memory_space<vmem>>, vector<1x128xf32>
    %c23_147 = arith.constant 23 : index
    %c0_148 = arith.constant 0 : index
    %171 = vector.load %arg11[%c23_147, %c0_148] : memref<48x128xf32, #tpu.memory_space<vmem>>, vector<1x128xf32>
    tpu.vector_store %arg11[%c23_147, %c0_148], %170 {strides = array<i32>} : memref<48x128xf32, #tpu.memory_space<vmem>>, vector<1x128xf32>,
    %172 = arith.index_cast %168 : i32 to index
    %c0_149 = arith.constant 0 : index
    %173 = vector.load %arg8[%172, %c0_149] : memref<16x1xf32, #tpu.memory_space<vmem>>, vector<1x1xf32>
    %c23_150 = arith.constant 23 : index
    %c0_151 = arith.constant 0 : index
    %174 = vector.load %arg12[%c23_150, %c0_151] : memref<48x1xf32, #tpu.memory_space<vmem>>, vector<1x1xf32>
    tpu.vector_store %arg12[%c23_150, %c0_151], %173 {strides = array<i32>} : memref<48x1xf32, #tpu.memory_space<vmem>>, vector<1x1xf32>,
    %c24 = arith.constant 24 : index
    %175 = memref.load %arg1[%c24] : memref<48xi32, #tpu.memory_space<smem>>
    %176 = arith.index_cast %175 : i32 to index
    %c0_152 = arith.constant 0 : index
    %177 = vector.load %arg9[%176, %c0_152] : memref<16x128xf32, #tpu.memory_space<vmem>>, vector<1x128xf32>
    %c24_153 = arith.constant 24 : index
    %c0_154 = arith.constant 0 : index
    %178 = vector.load %arg11[%c24_153, %c0_154] : memref<48x128xf32, #tpu.memory_space<vmem>>, vector<1x128xf32>
    tpu.vector_store %arg11[%c24_153, %c0_154], %177 {strides = array<i32>} : memref<48x128xf32, #tpu.memory_space<vmem>>, vector<1x128xf32>,
    %179 = arith.index_cast %175 : i32 to index
    %c0_155 = arith.constant 0 : index
    %180 = vector.load %arg8[%179, %c0_155] : memref<16x1xf32, #tpu.memory_space<vmem>>, vector<1x1xf32>
    %c24_156 = arith.constant 24 : index
    %c0_157 = arith.constant 0 : index
    %181 = vector.load %arg12[%c24_156, %c0_157] : memref<48x1xf32, #tpu.memory_space<vmem>>, vector<1x1xf32>
    tpu.vector_store %arg12[%c24_156, %c0_157], %180 {strides = array<i32>} : memref<48x1xf32, #tpu.memory_space<vmem>>, vector<1x1xf32>,
    %c25 = arith.constant 25 : index
    %182 = memref.load %arg1[%c25] : memref<48xi32, #tpu.memory_space<smem>>
    %183 = arith.index_cast %182 : i32 to index
    %c0_158 = arith.constant 0 : index
    %184 = vector.load %arg9[%183, %c0_158] : memref<16x128xf32, #tpu.memory_space<vmem>>, vector<1x128xf32>
    %c25_159 = arith.constant 25 : index
    %c0_160 = arith.constant 0 : index
    %185 = vector.load %arg11[%c25_159, %c0_160] : memref<48x128xf32, #tpu.memory_space<vmem>>, vector<1x128xf32>
    tpu.vector_store %arg11[%c25_159, %c0_160], %184 {strides = array<i32>} : memref<48x128xf32, #tpu.memory_space<vmem>>, vector<1x128xf32>,
    %186 = arith.index_cast %182 : i32 to index
    %c0_161 = arith.constant 0 : index
    %187 = vector.load %arg8[%186, %c0_161] : memref<16x1xf32, #tpu.memory_space<vmem>>, vector<1x1xf32>
    %c25_162 = arith.constant 25 : index
    %c0_163 = arith.constant 0 : index
    %188 = vector.load %arg12[%c25_162, %c0_163] : memref<48x1xf32, #tpu.memory_space<vmem>>, vector<1x1xf32>
    tpu.vector_store %arg12[%c25_162, %c0_163], %187 {strides = array<i32>} : memref<48x1xf32, #tpu.memory_space<vmem>>, vector<1x1xf32>,
    %c26 = arith.constant 26 : index
    %189 = memref.load %arg1[%c26] : memref<48xi32, #tpu.memory_space<smem>>
    %190 = arith.index_cast %189 : i32 to index
    %c0_164 = arith.constant 0 : index
    %191 = vector.load %arg9[%190, %c0_164] : memref<16x128xf32, #tpu.memory_space<vmem>>, vector<1x128xf32>
    %c26_165 = arith.constant 26 : index
    %c0_166 = arith.constant 0 : index
    %192 = vector.load %arg11[%c26_165, %c0_166] : memref<48x128xf32, #tpu.memory_space<vmem>>, vector<1x128xf32>
    tpu.vector_store %arg11[%c26_165, %c0_166], %191 {strides = array<i32>} : memref<48x128xf32, #tpu.memory_space<vmem>>, vector<1x128xf32>,
    %193 = arith.index_cast %189 : i32 to index
    %c0_167 = arith.constant 0 : index
    %194 = vector.load %arg8[%193, %c0_167] : memref<16x1xf32, #tpu.memory_space<vmem>>, vector<1x1xf32>
    %c26_168 = arith.constant 26 : index
    %c0_169 = arith.constant 0 : index
    %195 = vector.load %arg12[%c26_168, %c0_169] : memref<48x1xf32, #tpu.memory_space<vmem>>, vector<1x1xf32>
    tpu.vector_store %arg12[%c26_168, %c0_169], %194 {strides = array<i32>} : memref<48x1xf32, #tpu.memory_space<vmem>>, vector<1x1xf32>,
    %c27 = arith.constant 27 : index
    %196 = memref.load %arg1[%c27] : memref<48xi32, #tpu.memory_space<smem>>
    %197 = arith.index_cast %196 : i32 to index
    %c0_170 = arith.constant 0 : index
    %198 = vector.load %arg9[%197, %c0_170] : memref<16x128xf32, #tpu.memory_space<vmem>>, vector<1x128xf32>
    %c27_171 = arith.constant 27 : index
    %c0_172 = arith.constant 0 : index
    %199 = vector.load %arg11[%c27_171, %c0_172] : memref<48x128xf32, #tpu.memory_space<vmem>>, vector<1x128xf32>
    tpu.vector_store %arg11[%c27_171, %c0_172], %198 {strides = array<i32>} : memref<48x128xf32, #tpu.memory_space<vmem>>, vector<1x128xf32>,
    %200 = arith.index_cast %196 : i32 to index
    %c0_173 = arith.constant 0 : index
    %201 = vector.load %arg8[%200, %c0_173] : memref<16x1xf32, #tpu.memory_space<vmem>>, vector<1x1xf32>
    %c27_174 = arith.constant 27 : index
    %c0_175 = arith.constant 0 : index
    %202 = vector.load %arg12[%c27_174, %c0_175] : memref<48x1xf32, #tpu.memory_space<vmem>>, vector<1x1xf32>
    tpu.vector_store %arg12[%c27_174, %c0_175], %201 {strides = array<i32>} : memref<48x1xf32, #tpu.memory_space<vmem>>, vector<1x1xf32>,
    %c28 = arith.constant 28 : index
    %203 = memref.load %arg1[%c28] : memref<48xi32, #tpu.memory_space<smem>>
    %204 = arith.index_cast %203 : i32 to index
    %c0_176 = arith.constant 0 : index
    %205 = vector.load %arg9[%204, %c0_176] : memref<16x128xf32, #tpu.memory_space<vmem>>, vector<1x128xf32>
    %c28_177 = arith.constant 28 : index
    %c0_178 = arith.constant 0 : index
    %206 = vector.load %arg11[%c28_177, %c0_178] : memref<48x128xf32, #tpu.memory_space<vmem>>, vector<1x128xf32>
    tpu.vector_store %arg11[%c28_177, %c0_178], %205 {strides = array<i32>} : memref<48x128xf32, #tpu.memory_space<vmem>>, vector<1x128xf32>,
    %207 = arith.index_cast %203 : i32 to index
    %c0_179 = arith.constant 0 : index
    %208 = vector.load %arg8[%207, %c0_179] : memref<16x1xf32, #tpu.memory_space<vmem>>, vector<1x1xf32>
    %c28_180 = arith.constant 28 : index
    %c0_181 = arith.constant 0 : index
    %209 = vector.load %arg12[%c28_180, %c0_181] : memref<48x1xf32, #tpu.memory_space<vmem>>, vector<1x1xf32>
    tpu.vector_store %arg12[%c28_180, %c0_181], %208 {strides = array<i32>} : memref<48x1xf32, #tpu.memory_space<vmem>>, vector<1x1xf32>,
    %c29 = arith.constant 29 : index
    %210 = memref.load %arg1[%c29] : memref<48xi32, #tpu.memory_space<smem>>
    %211 = arith.index_cast %210 : i32 to index
    %c0_182 = arith.constant 0 : index
    %212 = vector.load %arg9[%211, %c0_182] : memref<16x128xf32, #tpu.memory_space<vmem>>, vector<1x128xf32>
    %c29_183 = arith.constant 29 : index
    %c0_184 = arith.constant 0 : index
    %213 = vector.load %arg11[%c29_183, %c0_184] : memref<48x128xf32, #tpu.memory_space<vmem>>, vector<1x128xf32>
    tpu.vector_store %arg11[%c29_183, %c0_184], %212 {strides = array<i32>} : memref<48x128xf32, #tpu.memory_space<vmem>>, vector<1x128xf32>,
    %214 = arith.index_cast %210 : i32 to index
    %c0_185 = arith.constant 0 : index
    %215 = vector.load %arg8[%214, %c0_185] : memref<16x1xf32, #tpu.memory_space<vmem>>, vector<1x1xf32>
    %c29_186 = arith.constant 29 : index
    %c0_187 = arith.constant 0 : index
    %216 = vector.load %arg12[%c29_186, %c0_187] : memref<48x1xf32, #tpu.memory_space<vmem>>, vector<1x1xf32>
    tpu.vector_store %arg12[%c29_186, %c0_187], %215 {strides = array<i32>} : memref<48x1xf32, #tpu.memory_space<vmem>>, vector<1x1xf32>,
    %c30 = arith.constant 30 : index
    %217 = memref.load %arg1[%c30] : memref<48xi32, #tpu.memory_space<smem>>
    %218 = arith.index_cast %217 : i32 to index
    %c0_188 = arith.constant 0 : index
    %219 = vector.load %arg9[%218, %c0_188] : memref<16x128xf32, #tpu.memory_space<vmem>>, vector<1x128xf32>
    %c30_189 = arith.constant 30 : index
    %c0_190 = arith.constant 0 : index
    %220 = vector.load %arg11[%c30_189, %c0_190] : memref<48x128xf32, #tpu.memory_space<vmem>>, vector<1x128xf32>
    tpu.vector_store %arg11[%c30_189, %c0_190], %219 {strides = array<i32>} : memref<48x128xf32, #tpu.memory_space<vmem>>, vector<1x128xf32>,
    %221 = arith.index_cast %217 : i32 to index
    %c0_191 = arith.constant 0 : index
    %222 = vector.load %arg8[%221, %c0_191] : memref<16x1xf32, #tpu.memory_space<vmem>>, vector<1x1xf32>
    %c30_192 = arith.constant 30 : index
    %c0_193 = arith.constant 0 : index
    %223 = vector.load %arg12[%c30_192, %c0_193] : memref<48x1xf32, #tpu.memory_space<vmem>>, vector<1x1xf32>
    tpu.vector_store %arg12[%c30_192, %c0_193], %222 {strides = array<i32>} : memref<48x1xf32, #tpu.memory_space<vmem>>, vector<1x1xf32>,
    %c31 = arith.constant 31 : index
    %224 = memref.load %arg1[%c31] : memref<48xi32, #tpu.memory_space<smem>>
    %225 = arith.index_cast %224 : i32 to index
    %c0_194 = arith.constant 0 : index
    %226 = vector.load %arg9[%225, %c0_194] : memref<16x128xf32, #tpu.memory_space<vmem>>, vector<1x128xf32>
    %c31_195 = arith.constant 31 : index
    %c0_196 = arith.constant 0 : index
    %227 = vector.load %arg11[%c31_195, %c0_196] : memref<48x128xf32, #tpu.memory_space<vmem>>, vector<1x128xf32>
    tpu.vector_store %arg11[%c31_195, %c0_196], %226 {strides = array<i32>} : memref<48x128xf32, #tpu.memory_space<vmem>>, vector<1x128xf32>,
    %228 = arith.index_cast %224 : i32 to index
    %c0_197 = arith.constant 0 : index
    %229 = vector.load %arg8[%228, %c0_197] : memref<16x1xf32, #tpu.memory_space<vmem>>, vector<1x1xf32>
    %c31_198 = arith.constant 31 : index
    %c0_199 = arith.constant 0 : index
    %230 = vector.load %arg12[%c31_198, %c0_199] : memref<48x1xf32, #tpu.memory_space<vmem>>, vector<1x1xf32>
    tpu.vector_store %arg12[%c31_198, %c0_199], %229 {strides = array<i32>} : memref<48x1xf32, #tpu.memory_space<vmem>>, vector<1x1xf32>,
    %c32 = arith.constant 32 : index
    %231 = memref.load %arg1[%c32] : memref<48xi32, #tpu.memory_space<smem>>
    %232 = arith.index_cast %231 : i32 to index
    %c0_200 = arith.constant 0 : index
    %233 = vector.load %arg9[%232, %c0_200] : memref<16x128xf32, #tpu.memory_space<vmem>>, vector<1x128xf32>
    %c32_201 = arith.constant 32 : index
    %c0_202 = arith.constant 0 : index
    %234 = vector.load %arg11[%c32_201, %c0_202] : memref<48x128xf32, #tpu.memory_space<vmem>>, vector<1x128xf32>
    tpu.vector_store %arg11[%c32_201, %c0_202], %233 {strides = array<i32>} : memref<48x128xf32, #tpu.memory_space<vmem>>, vector<1x128xf32>,
    %235 = arith.index_cast %231 : i32 to index
    %c0_203 = arith.constant 0 : index
    %236 = vector.load %arg8[%235, %c0_203] : memref<16x1xf32, #tpu.memory_space<vmem>>, vector<1x1xf32>
    %c32_204 = arith.constant 32 : index
    %c0_205 = arith.constant 0 : index
    %237 = vector.load %arg12[%c32_204, %c0_205] : memref<48x1xf32, #tpu.memory_space<vmem>>, vector<1x1xf32>
    tpu.vector_store %arg12[%c32_204, %c0_205], %236 {strides = array<i32>} : memref<48x1xf32, #tpu.memory_space<vmem>>, vector<1x1xf32>,
    %c33 = arith.constant 33 : index
    %238 = memref.load %arg1[%c33] : memref<48xi32, #tpu.memory_space<smem>>
    %239 = arith.index_cast %238 : i32 to index
    %c0_206 = arith.constant 0 : index
    %240 = vector.load %arg9[%239, %c0_206] : memref<16x128xf32, #tpu.memory_space<vmem>>, vector<1x128xf32>
    %c33_207 = arith.constant 33 : index
    %c0_208 = arith.constant 0 : index
    %241 = vector.load %arg11[%c33_207, %c0_208] : memref<48x128xf32, #tpu.memory_space<vmem>>, vector<1x128xf32>
    tpu.vector_store %arg11[%c33_207, %c0_208], %240 {strides = array<i32>} : memref<48x128xf32, #tpu.memory_space<vmem>>, vector<1x128xf32>,
    %242 = arith.index_cast %238 : i32 to index
    %c0_209 = arith.constant 0 : index
    %243 = vector.load %arg8[%242, %c0_209] : memref<16x1xf32, #tpu.memory_space<vmem>>, vector<1x1xf32>
    %c33_210 = arith.constant 33 : index
    %c0_211 = arith.constant 0 : index
    %244 = vector.load %arg12[%c33_210, %c0_211] : memref<48x1xf32, #tpu.memory_space<vmem>>, vector<1x1xf32>
    tpu.vector_store %arg12[%c33_210, %c0_211], %243 {strides = array<i32>} : memref<48x1xf32, #tpu.memory_space<vmem>>, vector<1x1xf32>,
    %c34 = arith.constant 34 : index
    %245 = memref.load %arg1[%c34] : memref<48xi32, #tpu.memory_space<smem>>
    %246 = arith.index_cast %245 : i32 to index
    %c0_212 = arith.constant 0 : index
    %247 = vector.load %arg9[%246, %c0_212] : memref<16x128xf32, #tpu.memory_space<vmem>>, vector<1x128xf32>
    %c34_213 = arith.constant 34 : index
    %c0_214 = arith.constant 0 : index
    %248 = vector.load %arg11[%c34_213, %c0_214] : memref<48x128xf32, #tpu.memory_space<vmem>>, vector<1x128xf32>
    tpu.vector_store %arg11[%c34_213, %c0_214], %247 {strides = array<i32>} : memref<48x128xf32, #tpu.memory_space<vmem>>, vector<1x128xf32>,
    %249 = arith.index_cast %245 : i32 to index
    %c0_215 = arith.constant 0 : index
    %250 = vector.load %arg8[%249, %c0_215] : memref<16x1xf32, #tpu.memory_space<vmem>>, vector<1x1xf32>
    %c34_216 = arith.constant 34 : index
    %c0_217 = arith.constant 0 : index
    %251 = vector.load %arg12[%c34_216, %c0_217] : memref<48x1xf32, #tpu.memory_space<vmem>>, vector<1x1xf32>
    tpu.vector_store %arg12[%c34_216, %c0_217], %250 {strides = array<i32>} : memref<48x1xf32, #tpu.memory_space<vmem>>, vector<1x1xf32>,
    %c35 = arith.constant 35 : index
    %252 = memref.load %arg1[%c35] : memref<48xi32, #tpu.memory_space<smem>>
    %253 = arith.index_cast %252 : i32 to index
    %c0_218 = arith.constant 0 : index
    %254 = vector.load %arg9[%253, %c0_218] : memref<16x128xf32, #tpu.memory_space<vmem>>, vector<1x128xf32>
    %c35_219 = arith.constant 35 : index
    %c0_220 = arith.constant 0 : index
    %255 = vector.load %arg11[%c35_219, %c0_220] : memref<48x128xf32, #tpu.memory_space<vmem>>, vector<1x128xf32>
    tpu.vector_store %arg11[%c35_219, %c0_220], %254 {strides = array<i32>} : memref<48x128xf32, #tpu.memory_space<vmem>>, vector<1x128xf32>,
    %256 = arith.index_cast %252 : i32 to index
    %c0_221 = arith.constant 0 : index
    %257 = vector.load %arg8[%256, %c0_221] : memref<16x1xf32, #tpu.memory_space<vmem>>, vector<1x1xf32>
    %c35_222 = arith.constant 35 : index
    %c0_223 = arith.constant 0 : index
    %258 = vector.load %arg12[%c35_222, %c0_223] : memref<48x1xf32, #tpu.memory_space<vmem>>, vector<1x1xf32>
    tpu.vector_store %arg12[%c35_222, %c0_223], %257 {strides = array<i32>} : memref<48x1xf32, #tpu.memory_space<vmem>>, vector<1x1xf32>,
    %c36 = arith.constant 36 : index
    %259 = memref.load %arg1[%c36] : memref<48xi32, #tpu.memory_space<smem>>
    %260 = arith.index_cast %259 : i32 to index
    %c0_224 = arith.constant 0 : index
    %261 = vector.load %arg9[%260, %c0_224] : memref<16x128xf32, #tpu.memory_space<vmem>>, vector<1x128xf32>
    %c36_225 = arith.constant 36 : index
    %c0_226 = arith.constant 0 : index
    %262 = vector.load %arg11[%c36_225, %c0_226] : memref<48x128xf32, #tpu.memory_space<vmem>>, vector<1x128xf32>
    tpu.vector_store %arg11[%c36_225, %c0_226], %261 {strides = array<i32>} : memref<48x128xf32, #tpu.memory_space<vmem>>, vector<1x128xf32>,
    %263 = arith.index_cast %259 : i32 to index
    %c0_227 = arith.constant 0 : index
    %264 = vector.load %arg8[%263, %c0_227] : memref<16x1xf32, #tpu.memory_space<vmem>>, vector<1x1xf32>
    %c36_228 = arith.constant 36 : index
    %c0_229 = arith.constant 0 : index
    %265 = vector.load %arg12[%c36_228, %c0_229] : memref<48x1xf32, #tpu.memory_space<vmem>>, vector<1x1xf32>
    tpu.vector_store %arg12[%c36_228, %c0_229], %264 {strides = array<i32>} : memref<48x1xf32, #tpu.memory_space<vmem>>, vector<1x1xf32>,
    %c37 = arith.constant 37 : index
    %266 = memref.load %arg1[%c37] : memref<48xi32, #tpu.memory_space<smem>>
    %267 = arith.index_cast %266 : i32 to index
    %c0_230 = arith.constant 0 : index
    %268 = vector.load %arg9[%267, %c0_230] : memref<16x128xf32, #tpu.memory_space<vmem>>, vector<1x128xf32>
    %c37_231 = arith.constant 37 : index
    %c0_232 = arith.constant 0 : index
    %269 = vector.load %arg11[%c37_231, %c0_232] : memref<48x128xf32, #tpu.memory_space<vmem>>, vector<1x128xf32>
    tpu.vector_store %arg11[%c37_231, %c0_232], %268 {strides = array<i32>} : memref<48x128xf32, #tpu.memory_space<vmem>>, vector<1x128xf32>,
    %270 = arith.index_cast %266 : i32 to index
    %c0_233 = arith.constant 0 : index
    %271 = vector.load %arg8[%270, %c0_233] : memref<16x1xf32, #tpu.memory_space<vmem>>, vector<1x1xf32>
    %c37_234 = arith.constant 37 : index
    %c0_235 = arith.constant 0 : index
    %272 = vector.load %arg12[%c37_234, %c0_235] : memref<48x1xf32, #tpu.memory_space<vmem>>, vector<1x1xf32>
    tpu.vector_store %arg12[%c37_234, %c0_235], %271 {strides = array<i32>} : memref<48x1xf32, #tpu.memory_space<vmem>>, vector<1x1xf32>,
    %c38 = arith.constant 38 : index
    %273 = memref.load %arg1[%c38] : memref<48xi32, #tpu.memory_space<smem>>
    %274 = arith.index_cast %273 : i32 to index
    %c0_236 = arith.constant 0 : index
    %275 = vector.load %arg9[%274, %c0_236] : memref<16x128xf32, #tpu.memory_space<vmem>>, vector<1x128xf32>
    %c38_237 = arith.constant 38 : index
    %c0_238 = arith.constant 0 : index
    %276 = vector.load %arg11[%c38_237, %c0_238] : memref<48x128xf32, #tpu.memory_space<vmem>>, vector<1x128xf32>
    tpu.vector_store %arg11[%c38_237, %c0_238], %275 {strides = array<i32>} : memref<48x128xf32, #tpu.memory_space<vmem>>, vector<1x128xf32>,
    %277 = arith.index_cast %273 : i32 to index
    %c0_239 = arith.constant 0 : index
    %278 = vector.load %arg8[%277, %c0_239] : memref<16x1xf32, #tpu.memory_space<vmem>>, vector<1x1xf32>
    %c38_240 = arith.constant 38 : index
    %c0_241 = arith.constant 0 : index
    %279 = vector.load %arg12[%c38_240, %c0_241] : memref<48x1xf32, #tpu.memory_space<vmem>>, vector<1x1xf32>
    tpu.vector_store %arg12[%c38_240, %c0_241], %278 {strides = array<i32>} : memref<48x1xf32, #tpu.memory_space<vmem>>, vector<1x1xf32>,
    %c39 = arith.constant 39 : index
    %280 = memref.load %arg1[%c39] : memref<48xi32, #tpu.memory_space<smem>>
    %281 = arith.index_cast %280 : i32 to index
    %c0_242 = arith.constant 0 : index
    %282 = vector.load %arg9[%281, %c0_242] : memref<16x128xf32, #tpu.memory_space<vmem>>, vector<1x128xf32>
    %c39_243 = arith.constant 39 : index
    %c0_244 = arith.constant 0 : index
    %283 = vector.load %arg11[%c39_243, %c0_244] : memref<48x128xf32, #tpu.memory_space<vmem>>, vector<1x128xf32>
    tpu.vector_store %arg11[%c39_243, %c0_244], %282 {strides = array<i32>} : memref<48x128xf32, #tpu.memory_space<vmem>>, vector<1x128xf32>,
    %284 = arith.index_cast %280 : i32 to index
    %c0_245 = arith.constant 0 : index
    %285 = vector.load %arg8[%284, %c0_245] : memref<16x1xf32, #tpu.memory_space<vmem>>, vector<1x1xf32>
    %c39_246 = arith.constant 39 : index
    %c0_247 = arith.constant 0 : index
    %286 = vector.load %arg12[%c39_246, %c0_247] : memref<48x1xf32, #tpu.memory_space<vmem>>, vector<1x1xf32>
    tpu.vector_store %arg12[%c39_246, %c0_247], %285 {strides = array<i32>} : memref<48x1xf32, #tpu.memory_space<vmem>>, vector<1x1xf32>,
    %c40 = arith.constant 40 : index
    %287 = memref.load %arg1[%c40] : memref<48xi32, #tpu.memory_space<smem>>
    %288 = arith.index_cast %287 : i32 to index
    %c0_248 = arith.constant 0 : index
    %289 = vector.load %arg9[%288, %c0_248] : memref<16x128xf32, #tpu.memory_space<vmem>>, vector<1x128xf32>
    %c40_249 = arith.constant 40 : index
    %c0_250 = arith.constant 0 : index
    %290 = vector.load %arg11[%c40_249, %c0_250] : memref<48x128xf32, #tpu.memory_space<vmem>>, vector<1x128xf32>
    tpu.vector_store %arg11[%c40_249, %c0_250], %289 {strides = array<i32>} : memref<48x128xf32, #tpu.memory_space<vmem>>, vector<1x128xf32>,
    %291 = arith.index_cast %287 : i32 to index
    %c0_251 = arith.constant 0 : index
    %292 = vector.load %arg8[%291, %c0_251] : memref<16x1xf32, #tpu.memory_space<vmem>>, vector<1x1xf32>
    %c40_252 = arith.constant 40 : index
    %c0_253 = arith.constant 0 : index
    %293 = vector.load %arg12[%c40_252, %c0_253] : memref<48x1xf32, #tpu.memory_space<vmem>>, vector<1x1xf32>
    tpu.vector_store %arg12[%c40_252, %c0_253], %292 {strides = array<i32>} : memref<48x1xf32, #tpu.memory_space<vmem>>, vector<1x1xf32>,
    %c41 = arith.constant 41 : index
    %294 = memref.load %arg1[%c41] : memref<48xi32, #tpu.memory_space<smem>>
    %295 = arith.index_cast %294 : i32 to index
    %c0_254 = arith.constant 0 : index
    %296 = vector.load %arg9[%295, %c0_254] : memref<16x128xf32, #tpu.memory_space<vmem>>, vector<1x128xf32>
    %c41_255 = arith.constant 41 : index
    %c0_256 = arith.constant 0 : index
    %297 = vector.load %arg11[%c41_255, %c0_256] : memref<48x128xf32, #tpu.memory_space<vmem>>, vector<1x128xf32>
    tpu.vector_store %arg11[%c41_255, %c0_256], %296 {strides = array<i32>} : memref<48x128xf32, #tpu.memory_space<vmem>>, vector<1x128xf32>,
    %298 = arith.index_cast %294 : i32 to index
    %c0_257 = arith.constant 0 : index
    %299 = vector.load %arg8[%298, %c0_257] : memref<16x1xf32, #tpu.memory_space<vmem>>, vector<1x1xf32>
    %c41_258 = arith.constant 41 : index
    %c0_259 = arith.constant 0 : index
    %300 = vector.load %arg12[%c41_258, %c0_259] : memref<48x1xf32, #tpu.memory_space<vmem>>, vector<1x1xf32>
    tpu.vector_store %arg12[%c41_258, %c0_259], %299 {strides = array<i32>} : memref<48x1xf32, #tpu.memory_space<vmem>>, vector<1x1xf32>,
    %c42 = arith.constant 42 : index
    %301 = memref.load %arg1[%c42] : memref<48xi32, #tpu.memory_space<smem>>
    %302 = arith.index_cast %301 : i32 to index
    %c0_260 = arith.constant 0 : index
    %303 = vector.load %arg9[%302, %c0_260] : memref<16x128xf32, #tpu.memory_space<vmem>>, vector<1x128xf32>
    %c42_261 = arith.constant 42 : index
    %c0_262 = arith.constant 0 : index
    %304 = vector.load %arg11[%c42_261, %c0_262] : memref<48x128xf32, #tpu.memory_space<vmem>>, vector<1x128xf32>
    tpu.vector_store %arg11[%c42_261, %c0_262], %303 {strides = array<i32>} : memref<48x128xf32, #tpu.memory_space<vmem>>, vector<1x128xf32>,
    %305 = arith.index_cast %301 : i32 to index
    %c0_263 = arith.constant 0 : index
    %306 = vector.load %arg8[%305, %c0_263] : memref<16x1xf32, #tpu.memory_space<vmem>>, vector<1x1xf32>
    %c42_264 = arith.constant 42 : index
    %c0_265 = arith.constant 0 : index
    %307 = vector.load %arg12[%c42_264, %c0_265] : memref<48x1xf32, #tpu.memory_space<vmem>>, vector<1x1xf32>
    tpu.vector_store %arg12[%c42_264, %c0_265], %306 {strides = array<i32>} : memref<48x1xf32, #tpu.memory_space<vmem>>, vector<1x1xf32>,
    %c43 = arith.constant 43 : index
    %308 = memref.load %arg1[%c43] : memref<48xi32, #tpu.memory_space<smem>>
    %309 = arith.index_cast %308 : i32 to index
    %c0_266 = arith.constant 0 : index
    %310 = vector.load %arg9[%309, %c0_266] : memref<16x128xf32, #tpu.memory_space<vmem>>, vector<1x128xf32>
    %c43_267 = arith.constant 43 : index
    %c0_268 = arith.constant 0 : index
    %311 = vector.load %arg11[%c43_267, %c0_268] : memref<48x128xf32, #tpu.memory_space<vmem>>, vector<1x128xf32>
    tpu.vector_store %arg11[%c43_267, %c0_268], %310 {strides = array<i32>} : memref<48x128xf32, #tpu.memory_space<vmem>>, vector<1x128xf32>,
    %312 = arith.index_cast %308 : i32 to index
    %c0_269 = arith.constant 0 : index
    %313 = vector.load %arg8[%312, %c0_269] : memref<16x1xf32, #tpu.memory_space<vmem>>, vector<1x1xf32>
    %c43_270 = arith.constant 43 : index
    %c0_271 = arith.constant 0 : index
    %314 = vector.load %arg12[%c43_270, %c0_271] : memref<48x1xf32, #tpu.memory_space<vmem>>, vector<1x1xf32>
    tpu.vector_store %arg12[%c43_270, %c0_271], %313 {strides = array<i32>} : memref<48x1xf32, #tpu.memory_space<vmem>>, vector<1x1xf32>,
    %c44 = arith.constant 44 : index
    %315 = memref.load %arg1[%c44] : memref<48xi32, #tpu.memory_space<smem>>
    %316 = arith.index_cast %315 : i32 to index
    %c0_272 = arith.constant 0 : index
    %317 = vector.load %arg9[%316, %c0_272] : memref<16x128xf32, #tpu.memory_space<vmem>>, vector<1x128xf32>
    %c44_273 = arith.constant 44 : index
    %c0_274 = arith.constant 0 : index
    %318 = vector.load %arg11[%c44_273, %c0_274] : memref<48x128xf32, #tpu.memory_space<vmem>>, vector<1x128xf32>
    tpu.vector_store %arg11[%c44_273, %c0_274], %317 {strides = array<i32>} : memref<48x128xf32, #tpu.memory_space<vmem>>, vector<1x128xf32>,
    %319 = arith.index_cast %315 : i32 to index
    %c0_275 = arith.constant 0 : index
    %320 = vector.load %arg8[%319, %c0_275] : memref<16x1xf32, #tpu.memory_space<vmem>>, vector<1x1xf32>
    %c44_276 = arith.constant 44 : index
    %c0_277 = arith.constant 0 : index
    %321 = vector.load %arg12[%c44_276, %c0_277] : memref<48x1xf32, #tpu.memory_space<vmem>>, vector<1x1xf32>
    tpu.vector_store %arg12[%c44_276, %c0_277], %320 {strides = array<i32>} : memref<48x1xf32, #tpu.memory_space<vmem>>, vector<1x1xf32>,
    %c45 = arith.constant 45 : index
    %322 = memref.load %arg1[%c45] : memref<48xi32, #tpu.memory_space<smem>>
    %323 = arith.index_cast %322 : i32 to index
    %c0_278 = arith.constant 0 : index
    %324 = vector.load %arg9[%323, %c0_278] : memref<16x128xf32, #tpu.memory_space<vmem>>, vector<1x128xf32>
    %c45_279 = arith.constant 45 : index
    %c0_280 = arith.constant 0 : index
    %325 = vector.load %arg11[%c45_279, %c0_280] : memref<48x128xf32, #tpu.memory_space<vmem>>, vector<1x128xf32>
    tpu.vector_store %arg11[%c45_279, %c0_280], %324 {strides = array<i32>} : memref<48x128xf32, #tpu.memory_space<vmem>>, vector<1x128xf32>,
    %326 = arith.index_cast %322 : i32 to index
    %c0_281 = arith.constant 0 : index
    %327 = vector.load %arg8[%326, %c0_281] : memref<16x1xf32, #tpu.memory_space<vmem>>, vector<1x1xf32>
    %c45_282 = arith.constant 45 : index
    %c0_283 = arith.constant 0 : index
    %328 = vector.load %arg12[%c45_282, %c0_283] : memref<48x1xf32, #tpu.memory_space<vmem>>, vector<1x1xf32>
    tpu.vector_store %arg12[%c45_282, %c0_283], %327 {strides = array<i32>} : memref<48x1xf32, #tpu.memory_space<vmem>>, vector<1x1xf32>,
    %c46 = arith.constant 46 : index
    %329 = memref.load %arg1[%c46] : memref<48xi32, #tpu.memory_space<smem>>
    %330 = arith.index_cast %329 : i32 to index
    %c0_284 = arith.constant 0 : index
    %331 = vector.load %arg9[%330, %c0_284] : memref<16x128xf32, #tpu.memory_space<vmem>>, vector<1x128xf32>
    %c46_285 = arith.constant 46 : index
    %c0_286 = arith.constant 0 : index
    %332 = vector.load %arg11[%c46_285, %c0_286] : memref<48x128xf32, #tpu.memory_space<vmem>>, vector<1x128xf32>
    tpu.vector_store %arg11[%c46_285, %c0_286], %331 {strides = array<i32>} : memref<48x128xf32, #tpu.memory_space<vmem>>, vector<1x128xf32>,
    %333 = arith.index_cast %329 : i32 to index
    %c0_287 = arith.constant 0 : index
    %334 = vector.load %arg8[%333, %c0_287] : memref<16x1xf32, #tpu.memory_space<vmem>>, vector<1x1xf32>
    %c46_288 = arith.constant 46 : index
    %c0_289 = arith.constant 0 : index
    %335 = vector.load %arg12[%c46_288, %c0_289] : memref<48x1xf32, #tpu.memory_space<vmem>>, vector<1x1xf32>
    tpu.vector_store %arg12[%c46_288, %c0_289], %334 {strides = array<i32>} : memref<48x1xf32, #tpu.memory_space<vmem>>, vector<1x1xf32>,
    %c47 = arith.constant 47 : index
    %336 = memref.load %arg1[%c47] : memref<48xi32, #tpu.memory_space<smem>>
    %337 = arith.index_cast %336 : i32 to index
    %c0_290 = arith.constant 0 : index
    %338 = vector.load %arg9[%337, %c0_290] : memref<16x128xf32, #tpu.memory_space<vmem>>, vector<1x128xf32>
    %c47_291 = arith.constant 47 : index
    %c0_292 = arith.constant 0 : index
    %339 = vector.load %arg11[%c47_291, %c0_292] : memref<48x128xf32, #tpu.memory_space<vmem>>, vector<1x128xf32>
    tpu.vector_store %arg11[%c47_291, %c0_292], %338 {strides = array<i32>} : memref<48x128xf32, #tpu.memory_space<vmem>>, vector<1x128xf32>,
    %340 = arith.index_cast %336 : i32 to index
    %c0_293 = arith.constant 0 : index
    %341 = vector.load %arg8[%340, %c0_293] : memref<16x1xf32, #tpu.memory_space<vmem>>, vector<1x1xf32>
    %c47_294 = arith.constant 47 : index
    %c0_295 = arith.constant 0 : index
    %342 = vector.load %arg12[%c47_294, %c0_295] : memref<48x1xf32, #tpu.memory_space<vmem>>, vector<1x1xf32>
    tpu.vector_store %arg12[%c47_294, %c0_295], %341 {strides = array<i32>} : memref<48x1xf32, #tpu.memory_space<vmem>>, vector<1x1xf32>,
    %c0_296 = arith.constant 0 : index
    %c0_297 = arith.constant 0 : index
    %343 = vector.load %arg11[%c0_296, %c0_297] : memref<48x128xf32, #tpu.memory_space<vmem>>, vector<48x128xf32>
    %c0_298 = arith.constant 0 : index
    %c0_299 = arith.constant 0 : index
    %344 = vector.load %arg12[%c0_298, %c0_299] : memref<48x1xf32, #tpu.memory_space<vmem>>, vector<48x1xf32>
    %345 = vector.extract_strided_slice %343 {offsets = [0, 0], sizes = [8, 128], strides = [1, 1]} : vector<48x128xf32> to vector<8x128xf32>
    %346 = vector.extract_strided_slice %343 {offsets = [8, 0], sizes = [8, 128], strides = [1, 1]} : vector<48x128xf32> to vector<8x128xf32>
    %347 = vector.extract_strided_slice %343 {offsets = [16, 0], sizes = [8, 128], strides = [1, 1]} : vector<48x128xf32> to vector<8x128xf32>
    %348 = vector.extract_strided_slice %343 {offsets = [24, 0], sizes = [8, 128], strides = [1, 1]} : vector<48x128xf32> to vector<8x128xf32>
    %349 = vector.extract_strided_slice %343 {offsets = [32, 0], sizes = [8, 128], strides = [1, 1]} : vector<48x128xf32> to vector<8x128xf32>
    %350 = vector.extract_strided_slice %343 {offsets = [40, 0], sizes = [8, 128], strides = [1, 1]} : vector<48x128xf32> to vector<8x128xf32>
    %351 = tpu.concatenate %345, %348, %348, %349, %345, %346 in 0 : vector<8x128xf32>, vector<8x128xf32>, vector<8x128xf32>, vector<8x128xf32>, vector<8x128xf32>, vector<8x128xf32> -> vector<48x128xf32>
    %352 = tpu.concatenate %346, %349, %350, %350, %347, %347 in 0 : vector<8x128xf32>, vector<8x128xf32>, vector<8x128xf32>, vector<8x128xf32>, vector<8x128xf32>, vector<8x128xf32> -> vector<48x128xf32>
    %c0_300 = arith.constant 0 : index
    %c0_301 = arith.constant 0 : index
    %353 = vector.load %arg5[%c0_300, %c0_301] : memref<256x3xf32, #tpu.memory_space<vmem>>, vector<256x3xf32>
    %354 = vector.extract_strided_slice %353 {offsets = [0, 0], sizes = [128, 3], strides = [1, 1]} : vector<256x3xf32> to vector<128x3xf32>
    %cst_302 = arith.constant dense<0.000000e+00> : vector<48x3xf32>
    %355 = tpu.matmul %351, %354, %cst_302 {dimension_numbers = #tpu.dot_dimension_numbers<[1], [0], [0], [1], [0, 0, 1, 1], [], []>} : vector<48x128xf32>, vector<128x3xf32>, vector<48x3xf32> -> vector<48x3xf32>
    %356 = vector.extract_strided_slice %353 {offsets = [128, 0], sizes = [128, 3], strides = [1, 1]} : vector<256x3xf32> to vector<128x3xf32>
    %cst_303 = arith.constant dense<0.000000e+00> : vector<48x3xf32>
    %357 = tpu.matmul %352, %356, %cst_303 {dimension_numbers = #tpu.dot_dimension_numbers<[1], [0], [0], [1], [0, 0, 1, 1], [], []>} : vector<48x128xf32>, vector<128x3xf32>, vector<48x3xf32> -> vector<48x3xf32>
    %358 = arith.addf %355, %357 : vector<48x3xf32>
    %c0_304 = arith.constant 0 : index
    %c0_305 = arith.constant 0 : index
    %359 = vector.load %arg6[%c0_304, %c0_305] : memref<1x3xf32, #tpu.memory_space<vmem>>, vector<1x3xf32>
    %360 = vector.broadcast %359 : vector<1x3xf32> to vector<48x3xf32>
    %361 = arith.addf %358, %360 : vector<48x3xf32>
    %cst_306 = arith.constant dense<0xFF800000> : vector<48xf32>
    %362 = vector.multi_reduction <maximumf>, %361, %cst_306 [1] : vector<48x3xf32> to vector<48xf32>
    %363 = vector.shape_cast %362 : vector<48xf32> to vector<48x1xf32>
    %364 = vector.broadcast %363 : vector<48x1xf32> to vector<48x3xf32>
    %365 = arith.subf %361, %364 : vector<48x3xf32>
    %366 = math.exp %365 : vector<48x3xf32>
    %cst_307 = arith.constant dense<0.000000e+00> : vector<48xf32>
    %367 = vector.multi_reduction <add>, %366, %cst_307 [1] : vector<48x3xf32> to vector<48xf32>
    %368 = vector.shape_cast %367 : vector<48xf32> to vector<48x1xf32>
    %369 = math.log %368 : vector<48x1xf32>
    %370 = arith.addf %363, %369 : vector<48x1xf32>
    %371 = vector.broadcast %370 : vector<48x1xf32> to vector<48x3xf32>
    %372 = arith.subf %361, %371 : vector<48x3xf32>
    %373 = tpu.iota {dimensions = array<i32: 1>} : vector<48x3xi32>
    %c0_308 = arith.constant 0 : index
    %c0_309 = arith.constant 0 : index
    %374 = vector.load %arg7[%c0_308, %c0_309] : memref<48x1xi32, #tpu.memory_space<vmem>>, vector<48x1xi32>
    %375 = vector.broadcast %374 : vector<48x1xi32> to vector<48x3xi32>
    %376 = arith.cmpi eq, %373, %375 : vector<48x3xi32>
    %377 = arith.extui %376 : vector<48x3xi1> to vector<48x3xi32>
    %378 = arith.sitofp %377 : vector<48x3xi32> to vector<48x3xf32>
    %379 = arith.mulf %378, %372 : vector<48x3xf32>
    %380 = vector.shape_cast %379 : vector<48x3xf32> to vector<1x48x3xf32>
    %cst_310 = arith.constant dense<0.000000e+00> : vector<1xf32>
    %381 = vector.multi_reduction <add>, %380, %cst_310 [1, 2] : vector<1x48x3xf32> to vector<1xf32>
    %382 = vector.shape_cast %381 : vector<1xf32> to vector<1x1x1xf32>
    %383 = vector.extract %382[0, 0, 0] : f32 from vector<1x1x1xf32>
    %cst_311 = arith.constant 0.000000e+00 : f32
    %384 = arith.subf %cst_311, %383 : f32
    %cst_312 = arith.constant 0.020833334 : f32
    %385 = arith.mulf %384, %cst_312 : f32
    %386 = vector.extract_strided_slice %351 {offsets = [0, 0], sizes = [16, 128], strides = [1, 1]} : vector<48x128xf32> to vector<16x128xf32>
    %387 = vector.extract_strided_slice %352 {offsets = [0, 0], sizes = [16, 128], strides = [1, 1]} : vector<48x128xf32> to vector<16x128xf32>
    %388 = arith.mulf %386, %387 : vector<16x128xf32>
    %cst_313 = arith.constant dense<0.000000e+00> : vector<16xf32>
    %389 = vector.multi_reduction <add>, %388, %cst_313 [1] : vector<16x128xf32> to vector<16xf32>
    %390 = vector.shape_cast %389 : vector<16xf32> to vector<16x1xf32>
    %391 = arith.mulf %386, %386 : vector<16x128xf32>
    %cst_314 = arith.constant dense<0.000000e+00> : vector<16xf32>
    %392 = vector.multi_reduction <add>, %391, %cst_314 [1] : vector<16x128xf32> to vector<16xf32>
    %393 = vector.shape_cast %392 : vector<16xf32> to vector<16x1xf32>
    %cst_315 = arith.constant 1.000000e-16 : f32
    %394 = vector.broadcast %cst_315 : f32 to vector<16x1xf32>
    %395 = arith.maximumf %393, %394 : vector<16x1xf32>
    %396 = arith.mulf %387, %387 : vector<16x128xf32>
    %cst_316 = arith.constant dense<0.000000e+00> : vector<16xf32>
    %397 = vector.multi_reduction <add>, %396, %cst_316 [1] : vector<16x128xf32> to vector<16xf32>
    %398 = vector.shape_cast %397 : vector<16xf32> to vector<16x1xf32>
    %cst_317 = arith.constant 1.000000e-16 : f32
    %399 = vector.broadcast %cst_317 : f32 to vector<16x1xf32>
    %400 = arith.maximumf %398, %399 : vector<16x1xf32>
    %401 = math.rsqrt %395 : vector<16x1xf32>
    %402 = arith.mulf %390, %401 : vector<16x1xf32>
    %403 = math.rsqrt %400 : vector<16x1xf32>
    %404 = arith.mulf %402, %403 : vector<16x1xf32>
    %405 = vector.extract_strided_slice %344 {offsets = [0, 0], sizes = [8, 1], strides = [1, 1]} : vector<48x1xf32> to vector<8x1xf32>
    %406 = vector.extract_strided_slice %344 {offsets = [24, 0], sizes = [8, 1], strides = [1, 1]} : vector<48x1xf32> to vector<8x1xf32>
    %407 = tpu.concatenate %405, %406 in 0 : vector<8x1xf32>, vector<8x1xf32> -> vector<16x1xf32>
    %408 = vector.extract_strided_slice %344 {offsets = [8, 0], sizes = [8, 1], strides = [1, 1]} : vector<48x1xf32> to vector<8x1xf32>
    %409 = vector.extract_strided_slice %344 {offsets = [32, 0], sizes = [8, 1], strides = [1, 1]} : vector<48x1xf32> to vector<8x1xf32>
    %410 = tpu.concatenate %408, %409 in 0 : vector<8x1xf32>, vector<8x1xf32> -> vector<16x1xf32>
    %cst_318 = arith.constant 6.000000e-01 : f32
    %411 = vector.broadcast %cst_318 : f32 to vector<16x1xf32>
    %412 = arith.mulf %411, %404 : vector<16x1xf32>
    %413 = arith.addf %407, %410 : vector<16x1xf32>
    %cst_319 = arith.constant 2.000000e-01 : f32
    %414 = vector.broadcast %cst_319 : f32 to vector<16x1xf32>
    %415 = arith.mulf %414, %413 : vector<16x1xf32>
    %416 = arith.addf %412, %415 : vector<16x1xf32>
    %417 = tpu.iota {dimensions = array<i32: 0>} : vector<16x1xi32>
    %c8_i32 = arith.constant 8 : i32
    %418 = vector.broadcast %c8_i32 : i32 to vector<16x1xi32>
    %419 = arith.cmpi slt, %417, %418 : vector<16x1xi32>
    %cst_320 = arith.constant 1.000000e+00 : f32
    %cst_321 = arith.constant 0.000000e+00 : f32
    %420 = vector.broadcast %cst_320 : f32 to vector<16x1xf32>
    %421 = vector.broadcast %cst_321 : f32 to vector<16x1xf32>
    %422 = arith.select %419, %420, %421 : vector<16x1xi1>, vector<16x1xf32>
    %423 = arith.subf %422, %416 : vector<16x1xf32>
    %424 = arith.mulf %423, %423 : vector<16x1xf32>
    %cst_322 = arith.constant 5.000000e-01 : f32
    %425 = vector.broadcast %cst_322 : f32 to vector<16x1xf32>
    %426 = arith.mulf %425, %424 : vector<16x1xf32>
    %427 = vector.shape_cast %426 : vector<16x1xf32> to vector<1x16x1xf32>
    %cst_323 = arith.constant dense<0.000000e+00> : vector<1xf32>
    %428 = vector.multi_reduction <add>, %427, %cst_323 [1, 2] : vector<1x16x1xf32> to vector<1xf32>
    %429 = vector.shape_cast %428 : vector<1xf32> to vector<1x1x1xf32>
    %430 = vector.extract %429[0, 0, 0] : f32 from vector<1x1x1xf32>
    %cst_324 = arith.constant 1.000000e-01 : f32
    %431 = arith.mulf %cst_324, %430 : f32
    %432 = arith.addf %385, %431 : f32
    %c0_325 = arith.constant 0 : index
    %c0_326 = arith.constant 0 : index
    %433 = memref.load %arg10[%c0_325, %c0_326] : memref<1x1xf32, #tpu.memory_space<smem>>
    memref.store %432, %arg10[%c0_325, %c0_326] : memref<1x1xf32, #tpu.memory_space<smem>>
    return
  }
  func.func @transform_0(%arg0: i32, %arg1: memref<48xi32, #tpu.memory_space<smem>>) -> (i32, i32) {
    %c0_i32 = arith.constant 0 : i32
    %c0_i32_0 = arith.constant 0 : i32
    %c0_i32_1 = arith.constant 0 : i32
    return %c0_i32, %c0_i32_0 : i32, i32
  }
  func.func @transform_1(%arg0: i32, %arg1: memref<48xi32, #tpu.memory_space<smem>>) -> (i32, i32) {
    %c0_i32 = arith.constant 0 : i32
    %c0_i32_0 = arith.constant 0 : i32
    %c0_i32_1 = arith.constant 0 : i32
    return %c0_i32, %c0_i32_0 : i32, i32
  }
  func.func @transform_2(%arg0: i32, %arg1: memref<48xi32, #tpu.memory_space<smem>>) -> (i32, i32) {
    %c0_i32 = arith.constant 0 : i32
    %c0_i32_0 = arith.constant 0 : i32
    %c0_i32_1 = arith.constant 0 : i32
    return %c0_i32, %c0_i32_0 : i32, i32
  }
  func.func @transform_3(%arg0: i32, %arg1: memref<48xi32, #tpu.memory_space<smem>>) -> (i32, i32) {
    %c0_i32 = arith.constant 0 : i32
    %c0_i32_0 = arith.constant 0 : i32
    %c0_i32_1 = arith.constant 0 : i32
    return %c0_i32, %c0_i32_0 : i32, i32
  }
  func.func @transform_4(%arg0: i32, %arg1: memref<48xi32, #tpu.memory_space<smem>>) -> (i32, i32) {
    %c0_i32 = arith.constant 0 : i32
    %c0_i32_0 = arith.constant 0 : i32
    %c0_i32_1 = arith.constant 0 : i32
    return %c0_i32, %c0_i32_0 : i32, i32
  }
  func.func @transform_5(%arg0: i32, %arg1: memref<48xi32, #tpu.memory_space<smem>>) -> (i32, i32) {
    %c0_i32 = arith.constant 0 : i32
    %c0_i32_0 = arith.constant 0 : i32
    %c0_i32_1 = arith.constant 0 : i32
    return %c0_i32, %c0_i32_0 : i32, i32
  }
  func.func @transform_6(%arg0: i32, %arg1: memref<48xi32, #tpu.memory_space<smem>>) -> (i32, i32) {
    %c0_i32 = arith.constant 0 : i32
    %c0_i32_0 = arith.constant 0 : i32
    %c0_i32_1 = arith.constant 0 : i32
    return %c0_i32, %c0_i32_0 : i32, i32
  }
  func.func @transform_7(%arg0: i32, %arg1: memref<48xi32, #tpu.memory_space<smem>>) -> (i32, i32) {
    %c0_i32 = arith.constant 0 : i32
    %c0_i32_0 = arith.constant 0 : i32
    %c0_i32_1 = arith.constant 0 : i32
    return %c0_i32, %c0_i32_0 : i32, i32
  }
  func.func @transform_8(%arg0: i32, %arg1: memref<48xi32, #tpu.memory_space<smem>>) -> (i32, i32) {
    %c0_i32 = arith.constant 0 : i32
    %c0_i32_0 = arith.constant 0 : i32
    %c0_i32_1 = arith.constant 0 : i32
    return %c0_i32, %c0_i32_0 : i32, i32
  }
}

</mosaic_0001>

<llo_original>
// kernel: _lambda_.1
$region0: #{_lambda_.1}
  #allocation0 [shape = 'u32[]', space=smem, size = 0x4, offset = 0x4, fixed_abs, tag = 'smem constant byte address 0x4 - core index']
  #allocation1 [shape = 'u32[144,128]{1,0:T(1,128)}', space=vmem, size = 0x12000, scoped, tag = 'internal scratch']
  #allocation2 [shape = 'f32[48,128]{1,0:T(8,128)}', space=vmem, size = 0x6000, scoped, tag = 'scratch operand']
  #allocation3 [shape = 'f32[48,1]{1,0:T(8,128)}', space=vmem, size = 0x6000, scoped, tag = 'scratch operand']
  #allocation4 [shape = 's32[1]{0}', space=sflag, size = 0x4, scoped, tag = 'scoped memory for _lambda_.1']
  #allocation5 [shape = 'u8[512]{0}', space=smem, size = 0x200, scoped, tag = 'prefetched SMEM operand 0']
  %s0 = inlined_call_operand.vmem [shape: s32[48], index: 0, kind: input, shape index: {}]
  %s1 = inlined_call_operand.vmem [shape: f32[16,64], index: 1, kind: input, shape index: {}]
  %s2 = inlined_call_operand.vmem [shape: f32[64,128], index: 2, kind: input, shape index: {}]
  %s3 = inlined_call_operand.vmem [shape: f32[1,128], index: 3, kind: input, shape index: {}]
  %s4 = inlined_call_operand.vmem [shape: f32[256,3], index: 4, kind: input, shape index: {}]
  %s5 = inlined_call_operand.vmem [shape: f32[1,3], index: 5, kind: input, shape index: {}]
  %s6 = inlined_call_operand.vmem [shape: s32[48,1], index: 6, kind: input, shape index: {}]
  %s7 = inlined_call_operand.vmem [shape: f32[16,1], index: 7, kind: input, shape index: {}]
  %s8 = inlined_call_operand.hbm [shape: f32[16,128], index: 8, kind: output, shape index: {0}]
  %s9 = inlined_call_operand.hbm [shape: f32[1,1], index: 9, kind: output, shape index: {1}]
  %10 = xla_tuple %s8, %s9
  %s11 = sld [smem:[#allocation0]]
  $region46: #{_lambda_.1} parent=0
    _
  %s13 = ssub.s32 1, %s11
  %s14 = scalar_select 0, %s13, %s11
  %s15 = sshll.u32 %s0, 4
  %s16 = int_to_ptr.vmem [resolvable:$true] %s15
  %18 = dma.vmem_to_smem %s16, 16, [#allocation5], [#allocation4]
  %19 = dma.done [#allocation4], 16
  %20 = sfence
  $region1: #{_lambda_.1} parent=0
    #allocation6 [shape = 'u8[8192]{0}', space=vmem, size = 0x2000, scoped, tag = 'output window, operand 0, single buffered']
    #allocation7 [shape = 's32[1]{0}', space=sflag, size = 0x4, scoped, tag = 'scoped memory for _lambda_.1']
    #allocation8 [shape = 's32[1]{0}', space=sflag, size = 0x4, scoped, tag = 'scoped memory for _lambda_.1']
    #allocation9 [shape = 'u8[512]{0}', space=smem, size = 0x200, scoped, tag = 'output window, operand 1, single buffered']
    %21 = vsyncpa [#allocation7], 0
    %22 = vsyncpa [#allocation8], 0
    // Predicated region
    $region2: #{_lambda_.1} parent=1 // pred_check
      _
    $region3: #{_lambda_.1} parent=1 // pred_check_branch
      %24 = sbr.rel (0) target = $region5
    $region4: #{_lambda_.1} parent=1 // pred_region
      _
    $region5: #{_lambda_.1} parent=1 // pred_fallthru
      _
    // Predicated region
    $region6: #{_lambda_.1} parent=1 // pred_check
      _
    $region7: #{_lambda_.1} parent=1 // pred_check_branch
      %26 = sbr.rel (0) target = $region9
    $region8: #{_lambda_.1} parent=1 // pred_region
      _
    $region9: #{_lambda_.1} parent=1 // pred_fallthru
      _
    // Predicated region
    $region10: #{_lambda_.1} parent=1 // pred_check
      _
    $region11: #{_lambda_.1} parent=1 // pred_check_branch
      %28 = sbr.rel (0) target = $region13
    $region12: #{_lambda_.1} parent=1 // pred_region
      _
    $region13: #{_lambda_.1} parent=1 // pred_fallthru
      _
    // Predicated region
    $region14: #{_lambda_.1} parent=1 // pred_check
      _
    $region15: #{_lambda_.1} parent=1 // pred_check_branch
      %30 = sbr.rel (0) target = $region17
    $region16: #{_lambda_.1} parent=1 // pred_region
      _
    $region17: #{_lambda_.1} parent=1 // pred_fallthru
      _
    // Predicated region
    $region18: #{_lambda_.1} parent=1 // pred_check
      _
    $region19: #{_lambda_.1} parent=1 // pred_check_branch
      %32 = sbr.rel (0) target = $region21
    $region20: #{_lambda_.1} parent=1 // pred_region
      _
    $region21: #{_lambda_.1} parent=1 // pred_fallthru
      _
    // Predicated region
    $region22: #{_lambda_.1} parent=1 // pred_check
      _
    $region23: #{_lambda_.1} parent=1 // pred_check_branch
      %34 = sbr.rel (0) target = $region25
    $region24: #{_lambda_.1} parent=1 // pred_region
      _
    $region25: #{_lambda_.1} parent=1 // pred_fallthru
      _
    // Predicated region
    $region26: #{_lambda_.1} parent=1 // pred_check
      _
    $region27: #{_lambda_.1} parent=1 // pred_check_branch
      %36 = sbr.rel (0) target = $region29
    $region28: #{_lambda_.1} parent=1 // pred_region
      _
    $region29: #{_lambda_.1} parent=1 // pred_fallthru
      _
    %v37 = vld [vmem:[%s1] sm:$0xff]
    %v38 = vld [vmem:[%s1 + $0x8] sm:$0xff]
    %v39 = vld [vmem:[%s2] sm:$0xff]
    %v40 = vld [vmem:[%s2 + $0x8] sm:$0xff]
    %v41 = vld [vmem:[%s2 + $0x10] sm:$0xff]
    %v42 = vld [vmem:[%s2 + $0x18] sm:$0xff]
    %v43 = vld [vmem:[%s2 + $0x20] sm:$0xff]
    %v44 = vld [vmem:[%s2 + $0x28] sm:$0xff]
    %v45 = vld [vmem:[%s2 + $0x30] sm:$0xff]
    %v46 = vld [vmem:[%s2 + $0x38] sm:$0xff]
    %v47 = vld [vmem:[%s3] sm:$0x1]
    %v49 = vlaneseq
    %v50 = vshrl.u32 %v49, 7
    %v51 = vsub.s32 0, %v50
    %v52 = vrot.slane %v47, %v51
    %vm54 = vcmask 523264
    %v56 = vsel %vm54, %v37, 0
    %v59 = vsel %vm54, %v38, 0
    %61 = vmatprep.subr.mxu0 0.0
    %62 = vmatpush1.msra.mxu0 %v39
    %63 = vmatprep.subr.mxu0 0.0
    %64 = vmatpush1.msra.mxu0 %v40
    %65 = vmatprep.subr.mxu0 0.0
    %66 = vmatpush1.msra.mxu0 %v41
    %67 = vmatprep.subr.mxu0 0.0
    %68 = vmatpush1.msra.mxu0 %v42
    %69 = vmatprep.subr.mxu0 0.0
    %70 = vmatpush1.msra.mxu0 %v43
    %71 = vmatprep.subr.mxu0 0.0
    %72 = vmatpush1.msra.mxu0 %v44
    %73 = vmatprep.subr.mxu0 0.0
    %74 = vmatpush1.msra.mxu0 %v45
    %75 = vmatprep.subr.mxu0 0.0
    %76 = vmatpush1.msra.mxu0 %v46
    %77 = vmatprep.subr.mxu0 0.0
    %78 = vmatpush1.msra.mxu0 0.0
    %79 = vmatprep.subr.mxu0 0.0
    %80 = vmatpush1.msra.mxu0 0.0
    %81 = vmatprep.subr.mxu0 0.0
    %82 = vmatpush1.msra.mxu0 0.0
    %83 = vmatprep.subr.mxu0 0.0
    %84 = vmatpush1.msra.mxu0 0.0
    %85 = vmatprep.subr.mxu0 0.0
    %86 = vmatpush1.msra.mxu0 0.0
    %87 = vmatprep.subr.mxu0 0.0
    %88 = vmatpush1.msra.mxu0 0.0
    %89 = vmatprep.subr.mxu0 0.0
    %90 = vmatpush1.msra.mxu0 0.0
    %91 = vmatprep.subr.mxu0 0.0
    %92 = vmatpush1.msra.mxu0 0.0
    %93 = vmatprep.subr.mxu0 0.0
    %94 = vmatpush1.msra.mxu0 0.0
    %95 = vmatprep.subr.mxu0 0.0
    %96 = vmatpush1.msra.mxu0 0.0
    %97 = vmatprep.subr.mxu0 0.0
    %98 = vmatpush1.msra.mxu0 0.0
    %99 = vmatprep.subr.mxu0 0.0
    %100 = vmatpush1.msra.mxu0 0.0
    %101 = vmatprep.subr.mxu0 0.0
    %102 = vmatpush1.msra.mxu0 0.0
    %103 = vmatprep.subr.mxu0 0.0
    %104 = vmatpush1.msra.mxu0 0.0
    %105 = vmatprep.subr.mxu0 0.0
    %106 = vmatpush1.msra.mxu0 0.0
    %107 = vmatprep.subr.mxu0 0.0
    %108 = vmatpush1.msra.mxu0 0.0
    %109 = vmatprep.subr.mxu0 0.0
    %110 = vmatpush1.msra.mxu0 0.0
    %111 = vmatprep.subr.mxu0 0.0
    %112 = vmatpush1.msra.mxu0 0.0
    %113 = vmatprep.subr.mxu0 0.0
    %114 = vmatpush1.msra.mxu0 0.0
    %115 = vmatprep.subr.mxu0 0.0
    %116 = vmatpush1.msra.mxu0 0.0
    %117 = vmatprep.subr.mxu0 0.0
    %118 = vmatpush1.msra.mxu0 0.0
    %119 = vmatprep.subr.mxu0 0.0
    %120 = vmatpush1.msra.mxu0 0.0
    %121 = vmatprep.subr.mxu0 0.0
    %122 = vmatpush1.msra.mxu0 0.0
    %123 = vmatprep.subr.mxu0 0.0
    %124 = vmatpush1.msra.mxu0 0.0
    %125 = vmatprep.mubr.f32.mxu0 0.0
    %126 = vmatmul.mubr.f32.gmra.mrb[0].mxu0 %v56
    %v127 = vpop.f32.mrb[0].mxu0
    %v128 = vadd.f32 %v52, %v127
    %v129 = vpop.f32.mrb[0].mxu0
    %130 = vmatprep.mubr.f32.mxu0 0.0
    %131 = vmatmul.mubr.f32.gmra.mrb[0].mxu0 %v59
    %v132 = vpop.f32.mrb[0].mxu0
    %v133 = vadd.f32 %v52, %v132
    %v134 = vpop.f32.mrb[0].mxu0
    %135 = vdwg.mxu0
    %136 = vst [vmem:[#allocation6] sm:$0xff] %v128
    %137 = vst [vmem:[#allocation6 + $0x8] sm:$0xff] %v133
    %s138 = sld [smem:[#allocation5]]
    %s139 = scalar_lea.vmem [#allocation6], %s138
    %v140 = vld [vmem:[%s139] sm:$0x1]
    %141 = vst [vmem:[#allocation2] sm:$0x1] %v140
    %s142 = scalar_lea.vmem %s7, %s138
    %v143 = vld [vmem:[%s142] sm:$0x1]
    %vm144 = vcmask 0
    %145 = vst.msk [vmem:[#allocation3] sm:$0x1] %vm144, %v143
    %s146 = sld [smem:[#allocation5 + $0x1]]
    %s147 = scalar_lea.vmem [#allocation6], %s146
    %v148 = vld [vmem:[%s147] sm:$0x1]
    %149 = vst [vmem:[#allocation2 + $0x1] sm:$0x1] %v148
    %s150 = scalar_lea.vmem %s7, %s146
    %v151 = vld [vmem:[%s150] sm:$0x1]
    %152 = vst.msk [vmem:[#allocation3 + $0x1] sm:$0x1] %vm144, %v151
    %s153 = sld [smem:[#allocation5 + $0x2]]
    %s154 = scalar_lea.vmem [#allocation6], %s153
    %v155 = vld [vmem:[%s154] sm:$0x1]
    %156 = vst [vmem:[#allocation2 + $0x2] sm:$0x1] %v155
    %s157 = scalar_lea.vmem %s7, %s153
    %v158 = vld [vmem:[%s157] sm:$0x1]
    %159 = vst.msk [vmem:[#allocation3 + $0x2] sm:$0x1] %vm144, %v158
    %s160 = sld [smem:[#allocation5 + $0x3]]
    %s161 = scalar_lea.vmem [#allocation6], %s160
    %v162 = vld [vmem:[%s161] sm:$0x1]
    %163 = vst [vmem:[#allocation2 + $0x3] sm:$0x1] %v162
    %s164 = scalar_lea.vmem %s7, %s160
    %v165 = vld [vmem:[%s164] sm:$0x1]
    %166 = vst.msk [vmem:[#allocation3 + $0x3] sm:$0x1] %vm144, %v165
    %s167 = sld [smem:[#allocation5 + $0x4]]
    %s168 = scalar_lea.vmem [#allocation6], %s167
    %v169 = vld [vmem:[%s168] sm:$0x1]
    %170 = vst [vmem:[#allocation2 + $0x4] sm:$0x1] %v169
    %s171 = scalar_lea.vmem %s7, %s167
    %v172 = vld [vmem:[%s171] sm:$0x1]
    %173 = vst.msk [vmem:[#allocation3 + $0x4] sm:$0x1] %vm144, %v172
    %s174 = sld [smem:[#allocation5 + $0x5]]
    %s175 = scalar_lea.vmem [#allocation6], %s174
    %v176 = vld [vmem:[%s175] sm:$0x1]
    %177 = vst [vmem:[#allocation2 + $0x5] sm:$0x1] %v176
    %s178 = scalar_lea.vmem %s7, %s174
    %v179 = vld [vmem:[%s178] sm:$0x1]
    %180 = vst.msk [vmem:[#allocation3 + $0x5] sm:$0x1] %vm144, %v179
    %s181 = sld [smem:[#allocation5 + $0x6]]
    %s182 = scalar_lea.vmem [#allocation6], %s181
    %v183 = vld [vmem:[%s182] sm:$0x1]
    %184 = vst [vmem:[#allocation2 + $0x6] sm:$0x1] %v183
    %s185 = scalar_lea.vmem %s7, %s181
    %v186 = vld [vmem:[%s185] sm:$0x1]
    %187 = vst.msk [vmem:[#allocation3 + $0x6] sm:$0x1] %vm144, %v186
    %s188 = sld [smem:[#allocation5 + $0x7]]
    %s189 = scalar_lea.vmem [#allocation6], %s188
    %v190 = vld [vmem:[%s189] sm:$0x1]
    %191 = vst [vmem:[#allocation2 + $0x7] sm:$0x1] %v190
    %s192 = scalar_lea.vmem %s7, %s188
    %v193 = vld [vmem:[%s192] sm:$0x1]
    %194 = vst.msk [vmem:[#allocation3 + $0x7] sm:$0x1] %vm144, %v193
    %s195 = sld [smem:[#allocation5 + $0x8]]
    %s196 = scalar_lea.vmem [#allocation6], %s195
    %v197 = vld [vmem:[%s196] sm:$0x1]
    %198 = vst [vmem:[#allocation2 + $0x8] sm:$0x1] %v197
    %s199 = scalar_lea.vmem %s7, %s195
    %v200 = vld [vmem:[%s199] sm:$0x1]
    %201 = vst.msk [vmem:[#allocation3 + $0x8] sm:$0x1] %vm144, %v200
    %s202 = sld [smem:[#allocation5 + $0x9]]
    %s203 = scalar_lea.vmem [#allocation6], %s202
    %v204 = vld [vmem:[%s203] sm:$0x1]
    %205 = vst [vmem:[#allocation2 + $0x9] sm:$0x1] %v204
    %s206 = scalar_lea.vmem %s7, %s202
    %v207 = vld [vmem:[%s206] sm:$0x1]
    %208 = vst.msk [vmem:[#allocation3 + $0x9] sm:$0x1] %vm144, %v207
    %s209 = sld [smem:[#allocation5 + $0xa]]
    %s210 = scalar_lea.vmem [#allocation6], %s209
    %v211 = vld [vmem:[%s210] sm:$0x1]
    %212 = vst [vmem:[#allocation2 + $0xa] sm:$0x1] %v211
    %s213 = scalar_lea.vmem %s7, %s209
    %v214 = vld [vmem:[%s213] sm:$0x1]
    %215 = vst.msk [vmem:[#allocation3 + $0xa] sm:$0x1] %vm144, %v214
    %s216 = sld [smem:[#allocation5 + $0xb]]
    %s217 = scalar_lea.vmem [#allocation6], %s216
    %v218 = vld [vmem:[%s217] sm:$0x1]
    %219 = vst [vmem:[#allocation2 + $0xb] sm:$0x1] %v218
    %s220 = scalar_lea.vmem %s7, %s216
    %v221 = vld [vmem:[%s220] sm:$0x1]
    %222 = vst.msk [vmem:[#allocation3 + $0xb] sm:$0x1] %vm144, %v221
    %s223 = sld [smem:[#allocation5 + $0xc]]
    %s224 = scalar_lea.vmem [#allocation6], %s223
    %v225 = vld [vmem:[%s224] sm:$0x1]
    %226 = vst [vmem:[#allocation2 + $0xc] sm:$0x1] %v225
    %s227 = scalar_lea.vmem %s7, %s223
    %v228 = vld [vmem:[%s227] sm:$0x1]
    %229 = vst.msk [vmem:[#allocation3 + $0xc] sm:$0x1] %vm144, %v228
    %s230 = sld [smem:[#allocation5 + $0xd]]
    %s231 = scalar_lea.vmem [#allocation6], %s230
    %v232 = vld [vmem:[%s231] sm:$0x1]
    %233 = vst [vmem:[#allocation2 + $0xd] sm:$0x1] %v232
    %s234 = scalar_lea.vmem %s7, %s230
    %v235 = vld [vmem:[%s234] sm:$0x1]
    %236 = vst.msk [vmem:[#allocation3 + $0xd] sm:$0x1] %vm144, %v235
    %s237 = sld [smem:[#allocation5 + $0xe]]
    %s238 = scalar_lea.vmem [#allocation6], %s237
    %v239 = vld [vmem:[%s238] sm:$0x1]
    %240 = vst [vmem:[#allocation2 + $0xe] sm:$0x1] %v239
    %s241 = scalar_lea.vmem %s7, %s237
    %v242 = vld [vmem:[%s241] sm:$0x1]
    %243 = vst.msk [vmem:[#allocation3 + $0xe] sm:$0x1] %vm144, %v242
    %s244 = sld [smem:[#allocation5 + $0xf]]
    %s245 = scalar_lea.vmem [#allocation6], %s244
    %v246 = vld [vmem:[%s245] sm:$0x1]
    %247 = vst [vmem:[#allocation2 + $0xf] sm:$0x1] %v246
    %s248 = scalar_lea.vmem %s7, %s244
    %v249 = vld [vmem:[%s248] sm:$0x1]
    %250 = vst.msk [vmem:[#allocation3 + $0xf] sm:$0x1] %vm144, %v249
    %s251 = sld [smem:[#allocation5 + $0x10]]
    %s252 = scalar_lea.vmem [#allocation6], %s251
    %v253 = vld [vmem:[%s252] sm:$0x1]
    %254 = vst [vmem:[#allocation2 + $0x10] sm:$0x1] %v253
    %s255 = scalar_lea.vmem %s7, %s251
    %v256 = vld [vmem:[%s255] sm:$0x1]
    %257 = vst.msk [vmem:[#allocation3 + $0x10] sm:$0x1] %vm144, %v256
    %s258 = sld [smem:[#allocation5 + $0x11]]
    %s259 = scalar_lea.vmem [#allocation6], %s258
    %v260 = vld [vmem:[%s259] sm:$0x1]
    %261 = vst [vmem:[#allocation2 + $0x11] sm:$0x1] %v260
    %s262 = scalar_lea.vmem %s7, %s258
    %v263 = vld [vmem:[%s262] sm:$0x1]
    %264 = vst.msk [vmem:[#allocation3 + $0x11] sm:$0x1] %vm144, %v263
    %s265 = sld [smem:[#allocation5 + $0x12]]
    %s266 = scalar_lea.vmem [#allocation6], %s265
    %v267 = vld [vmem:[%s266] sm:$0x1]
    %268 = vst [vmem:[#allocation2 + $0x12] sm:$0x1] %v267
    %s269 = scalar_lea.vmem %s7, %s265
    %v270 = vld [vmem:[%s269] sm:$0x1]
    %271 = vst.msk [vmem:[#allocation3 + $0x12] sm:$0x1] %vm144, %v270
    %s272 = sld [smem:[#allocation5 + $0x13]]
    %s273 = scalar_lea.vmem [#allocation6], %s272
    %v274 = vld [vmem:[%s273] sm:$0x1]
    %275 = vst [vmem:[#allocation2 + $0x13] sm:$0x1] %v274
    %s276 = scalar_lea.vmem %s7, %s272
    %v277 = vld [vmem:[%s276] sm:$0x1]
    %278 = vst.msk [vmem:[#allocation3 + $0x13] sm:$0x1] %vm144, %v277
    %s279 = sld [smem:[#allocation5 + $0x14]]
    %s280 = scalar_lea.vmem [#allocation6], %s279
    %v281 = vld [vmem:[%s280] sm:$0x1]
    %282 = vst [vmem:[#allocation2 + $0x14] sm:$0x1] %v281
    %s283 = scalar_lea.vmem %s7, %s279
    %v284 = vld [vmem:[%s283] sm:$0x1]
    %285 = vst.msk [vmem:[#allocation3 + $0x14] sm:$0x1] %vm144, %v284
    %s286 = sld [smem:[#allocation5 + $0x15]]
    %s287 = scalar_lea.vmem [#allocation6], %s286
    %v288 = vld [vmem:[%s287] sm:$0x1]
    %289 = vst [vmem:[#allocation2 + $0x15] sm:$0x1] %v288
    %s290 = scalar_lea.vmem %s7, %s286
    %v291 = vld [vmem:[%s290] sm:$0x1]
    %292 = vst.msk [vmem:[#allocation3 + $0x15] sm:$0x1] %vm144, %v291
    %s293 = sld [smem:[#allocation5 + $0x16]]
    %s294 = scalar_lea.vmem [#allocation6], %s293
    %v295 = vld [vmem:[%s294] sm:$0x1]
    %296 = vst [vmem:[#allocation2 + $0x16] sm:$0x1] %v295
    %s297 = scalar_lea.vmem %s7, %s293
    %v298 = vld [vmem:[%s297] sm:$0x1]
    %299 = vst.msk [vmem:[#allocation3 + $0x16] sm:$0x1] %vm144, %v298
    %s300 = sld [smem:[#allocation5 + $0x17]]
    %s301 = scalar_lea.vmem [#allocation6], %s300
    %v302 = vld [vmem:[%s301] sm:$0x1]
    %303 = vst [vmem:[#allocation2 + $0x17] sm:$0x1] %v302
    %s304 = scalar_lea.vmem %s7, %s300
    %v305 = vld [vmem:[%s304] sm:$0x1]
    %306 = vst.msk [vmem:[#allocation3 + $0x17] sm:$0x1] %vm144, %v305
    %s307 = sld [smem:[#allocation5 + $0x18]]
    %s308 = scalar_lea.vmem [#allocation6], %s307
    %v309 = vld [vmem:[%s308] sm:$0x1]
    %310 = vst [vmem:[#allocation2 + $0x18] sm:$0x1] %v309
    %s311 = scalar_lea.vmem %s7, %s307
    %v312 = vld [vmem:[%s311] sm:$0x1]
    %313 = vst.msk [vmem:[#allocation3 + $0x18] sm:$0x1] %vm144, %v312
    %s314 = sld [smem:[#allocation5 + $0x19]]
    %s315 = scalar_lea.vmem [#allocation6], %s314
    %v316 = vld [vmem:[%s315] sm:$0x1]
    %317 = vst [vmem:[#allocation2 + $0x19] sm:$0x1] %v316
    %s318 = scalar_lea.vmem %s7, %s314
    %v319 = vld [vmem:[%s318] sm:$0x1]
    %320 = vst.msk [vmem:[#allocation3 + $0x19] sm:$0x1] %vm144, %v319
    %s321 = sld [smem:[#allocation5 + $0x1a]]
    %s322 = scalar_lea.vmem [#allocation6], %s321
    %v323 = vld [vmem:[%s322] sm:$0x1]
    %324 = vst [vmem:[#allocation2 + $0x1a] sm:$0x1] %v323
    %s325 = scalar_lea.vmem %s7, %s321
    %v326 = vld [vmem:[%s325] sm:$0x1]
    %327 = vst.msk [vmem:[#allocation3 + $0x1a] sm:$0x1] %vm144, %v326
    %s328 = sld [smem:[#allocation5 + $0x1b]]
    %s329 = scalar_lea.vmem [#allocation6], %s328
    %v330 = vld [vmem:[%s329] sm:$0x1]
    %331 = vst [vmem:[#allocation2 + $0x1b] sm:$0x1] %v330
    %s332 = scalar_lea.vmem %s7, %s328
    %v333 = vld [vmem:[%s332] sm:$0x1]
    %334 = vst.msk [vmem:[#allocation3 + $0x1b] sm:$0x1] %vm144, %v333
    %s335 = sld [smem:[#allocation5 + $0x1c]]
    %s336 = scalar_lea.vmem [#allocation6], %s335
    %v337 = vld [vmem:[%s336] sm:$0x1]
    %338 = vst [vmem:[#allocation2 + $0x1c] sm:$0x1] %v337
    %s339 = scalar_lea.vmem %s7, %s335
    %v340 = vld [vmem:[%s339] sm:$0x1]
    %341 = vst.msk [vmem:[#allocation3 + $0x1c] sm:$0x1] %vm144, %v340
    %s342 = sld [smem:[#allocation5 + $0x1d]]
    %s343 = scalar_lea.vmem [#allocation6], %s342
    %v344 = vld [vmem:[%s343] sm:$0x1]
    %345 = vst [vmem:[#allocation2 + $0x1d] sm:$0x1] %v344
    %s346 = scalar_lea.vmem %s7, %s342
    %v347 = vld [vmem:[%s346] sm:$0x1]
    %348 = vst.msk [vmem:[#allocation3 + $0x1d] sm:$0x1] %vm144, %v347
    %s349 = sld [smem:[#allocation5 + $0x1e]]
    %s350 = scalar_lea.vmem [#allocation6], %s349
    %v351 = vld [vmem:[%s350] sm:$0x1]
    %352 = vst [vmem:[#allocation2 + $0x1e] sm:$0x1] %v351
    %s353 = scalar_lea.vmem %s7, %s349
    %v354 = vld [vmem:[%s353] sm:$0x1]
    %355 = vst.msk [vmem:[#allocation3 + $0x1e] sm:$0x1] %vm144, %v354
    %s356 = sld [smem:[#allocation5 + $0x1f]]
    %s357 = scalar_lea.vmem [#allocation6], %s356
    %v358 = vld [vmem:[%s357] sm:$0x1]
    %359 = vst [vmem:[#allocation2 + $0x1f] sm:$0x1] %v358
    %s360 = scalar_lea.vmem %s7, %s356
    %v361 = vld [vmem:[%s360] sm:$0x1]
    %362 = vst.msk [vmem:[#allocation3 + $0x1f] sm:$0x1] %vm144, %v361
    %s363 = sld [smem:[#allocation5 + $0x20]]
    %s364 = scalar_lea.vmem [#allocation6], %s363
    %v365 = vld [vmem:[%s364] sm:$0x1]
    %366 = vst [vmem:[#allocation2 + $0x20] sm:$0x1] %v365
    %s367 = scalar_lea.vmem %s7, %s363
    %v368 = vld [vmem:[%s367] sm:$0x1]
    %369 = vst.msk [vmem:[#allocation3 + $0x20] sm:$0x1] %vm144, %v368
    %s370 = sld [smem:[#allocation5 + $0x21]]
    %s371 = scalar_lea.vmem [#allocation6], %s370
    %v372 = vld [vmem:[%s371] sm:$0x1]
    %373 = vst [vmem:[#allocation2 + $0x21] sm:$0x1] %v372
    %s374 = scalar_lea.vmem %s7, %s370
    %v375 = vld [vmem:[%s374] sm:$0x1]
    %376 = vst.msk [vmem:[#allocation3 + $0x21] sm:$0x1] %vm144, %v375
    %s377 = sld [smem:[#allocation5 + $0x22]]
    %s378 = scalar_lea.vmem [#allocation6], %s377
    %v379 = vld [vmem:[%s378] sm:$0x1]
    %380 = vst [vmem:[#allocation2 + $0x22] sm:$0x1] %v379
    %s381 = scalar_lea.vmem %s7, %s377
    %v382 = vld [vmem:[%s381] sm:$0x1]
    %383 = vst.msk [vmem:[#allocation3 + $0x22] sm:$0x1] %vm144, %v382
    %s384 = sld [smem:[#allocation5 + $0x23]]
    %s385 = scalar_lea.vmem [#allocation6], %s384
    %v386 = vld [vmem:[%s385] sm:$0x1]
    %387 = vst [vmem:[#allocation2 + $0x23] sm:$0x1] %v386
    %s388 = scalar_lea.vmem %s7, %s384
    %v389 = vld [vmem:[%s388] sm:$0x1]
    %390 = vst.msk [vmem:[#allocation3 + $0x23] sm:$0x1] %vm144, %v389
    %s391 = sld [smem:[#allocation5 + $0x24]]
    %s392 = scalar_lea.vmem [#allocation6], %s391
    %v393 = vld [vmem:[%s392] sm:$0x1]
    %394 = vst [vmem:[#allocation2 + $0x24] sm:$0x1] %v393
    %s395 = scalar_lea.vmem %s7, %s391
    %v396 = vld [vmem:[%s395] sm:$0x1]
    %397 = vst.msk [vmem:[#allocation3 + $0x24] sm:$0x1] %vm144, %v396
    %s398 = sld [smem:[#allocation5 + $0x25]]
    %s399 = scalar_lea.vmem [#allocation6], %s398
    %v400 = vld [vmem:[%s399] sm:$0x1]
    %401 = vst [vmem:[#allocation2 + $0x25] sm:$0x1] %v400
    %s402 = scalar_lea.vmem %s7, %s398
    %v403 = vld [vmem:[%s402] sm:$0x1]
    %404 = vst.msk [vmem:[#allocation3 + $0x25] sm:$0x1] %vm144, %v403
    %s405 = sld [smem:[#allocation5 + $0x26]]
    %s406 = scalar_lea.vmem [#allocation6], %s405
    %v407 = vld [vmem:[%s406] sm:$0x1]
    %408 = vst [vmem:[#allocation2 + $0x26] sm:$0x1] %v407
    %s409 = scalar_lea.vmem %s7, %s405
    %v410 = vld [vmem:[%s409] sm:$0x1]
    %411 = vst.msk [vmem:[#allocation3 + $0x26] sm:$0x1] %vm144, %v410
    %s412 = sld [smem:[#allocation5 + $0x27]]
    %s413 = scalar_lea.vmem [#allocation6], %s412
    %v414 = vld [vmem:[%s413] sm:$0x1]
    %415 = vst [vmem:[#allocation2 + $0x27] sm:$0x1] %v414
    %s416 = scalar_lea.vmem %s7, %s412
    %v417 = vld [vmem:[%s416] sm:$0x1]
    %418 = vst.msk [vmem:[#allocation3 + $0x27] sm:$0x1] %vm144, %v417
    %s419 = sld [smem:[#allocation5 + $0x28]]
    %s420 = scalar_lea.vmem [#allocation6], %s419
    %v421 = vld [vmem:[%s420] sm:$0x1]
    %422 = vst [vmem:[#allocation2 + $0x28] sm:$0x1] %v421
    %s423 = scalar_lea.vmem %s7, %s419
    %v424 = vld [vmem:[%s423] sm:$0x1]
    %425 = vst.msk [vmem:[#allocation3 + $0x28] sm:$0x1] %vm144, %v424
    %s426 = sld [smem:[#allocation5 + $0x29]]
    %s427 = scalar_lea.vmem [#allocation6], %s426
    %v428 = vld [vmem:[%s427] sm:$0x1]
    %429 = vst [vmem:[#allocation2 + $0x29] sm:$0x1] %v428
    %s430 = scalar_lea.vmem %s7, %s426
    %v431 = vld [vmem:[%s430] sm:$0x1]
    %432 = vst.msk [vmem:[#allocation3 + $0x29] sm:$0x1] %vm144, %v431
    %s433 = sld [smem:[#allocation5 + $0x2a]]
    %s434 = scalar_lea.vmem [#allocation6], %s433
    %v435 = vld [vmem:[%s434] sm:$0x1]
    %436 = vst [vmem:[#allocation2 + $0x2a] sm:$0x1] %v435
    %s437 = scalar_lea.vmem %s7, %s433
    %v438 = vld [vmem:[%s437] sm:$0x1]
    %439 = vst.msk [vmem:[#allocation3 + $0x2a] sm:$0x1] %vm144, %v438
    %s440 = sld [smem:[#allocation5 + $0x2b]]
    %s441 = scalar_lea.vmem [#allocation6], %s440
    %v442 = vld [vmem:[%s441] sm:$0x1]
    %443 = vst [vmem:[#allocation2 + $0x2b] sm:$0x1] %v442
    %s444 = scalar_lea.vmem %s7, %s440
    %v445 = vld [vmem:[%s444] sm:$0x1]
    %446 = vst.msk [vmem:[#allocation3 + $0x2b] sm:$0x1] %vm144, %v445
    %s447 = sld [smem:[#allocation5 + $0x2c]]
    %s448 = scalar_lea.vmem [#allocation6], %s447
    %v449 = vld [vmem:[%s448] sm:$0x1]
    %450 = vst [vmem:[#allocation2 + $0x2c] sm:$0x1] %v449
    %s451 = scalar_lea.vmem %s7, %s447
    %v452 = vld [vmem:[%s451] sm:$0x1]
    %453 = vst.msk [vmem:[#allocation3 + $0x2c] sm:$0x1] %vm144, %v452
    %s454 = sld [smem:[#allocation5 + $0x2d]]
    %s455 = scalar_lea.vmem [#allocation6], %s454
    %v456 = vld [vmem:[%s455] sm:$0x1]
    %457 = vst [vmem:[#allocation2 + $0x2d] sm:$0x1] %v456
    %s458 = scalar_lea.vmem %s7, %s454
    %v459 = vld [vmem:[%s458] sm:$0x1]
    %460 = vst.msk [vmem:[#allocation3 + $0x2d] sm:$0x1] %vm144, %v459
    %s461 = sld [smem:[#allocation5 + $0x2e]]
    %s462 = scalar_lea.vmem [#allocation6], %s461
    %v463 = vld [vmem:[%s462] sm:$0x1]
    %464 = vst [vmem:[#allocation2 + $0x2e] sm:$0x1] %v463
    %s465 = scalar_lea.vmem %s7, %s461
    %v466 = vld [vmem:[%s465] sm:$0x1]
    %467 = vst.msk [vmem:[#allocation3 + $0x2e] sm:$0x1] %vm144, %v466
    %s468 = sld [smem:[#allocation5 + $0x2f]]
    %s469 = scalar_lea.vmem [#allocation6], %s468
    %v470 = vld [vmem:[%s469] sm:$0x1]
    %471 = vst [vmem:[#allocation2 + $0x2f] sm:$0x1] %v470
    %s472 = scalar_lea.vmem %s7, %s468
    %v473 = vld [vmem:[%s472] sm:$0x1]
    %474 = vst.msk [vmem:[#allocation3 + $0x2f] sm:$0x1] %vm144, %v473
    %v475 = vld [vmem:[#allocation2] sm:$0xff]
    %v476 = vld [vmem:[#allocation2 + $0x8] sm:$0xff]
    %v477 = vld [vmem:[#allocation2 + $0x10] sm:$0xff]
    %v478 = vld [vmem:[#allocation2 + $0x18] sm:$0xff]
    %v479 = vld [vmem:[#allocation2 + $0x20] sm:$0xff]
    %v480 = vld [vmem:[#allocation2 + $0x28] sm:$0xff]
    %v481 = vld [vmem:[#allocation3] sm:$0xff]
    %v482 = vld [vmem:[#allocation3 + $0x8] sm:$0xff]
    %v483 = vld [vmem:[#allocation3 + $0x18] sm:$0xff]
    %v484 = vld [vmem:[#allocation3 + $0x20] sm:$0xff]
    %v485 = vld [vmem:[%s4] sm:$0xff]
    %v486 = vld [vmem:[%s4 + $0x8] sm:$0xff]
    %v487 = vld [vmem:[%s4 + $0x10] sm:$0xff]
    %v488 = vld [vmem:[%s4 + $0x18] sm:$0xff]
    %v489 = vld [vmem:[%s4 + $0x20] sm:$0xff]
    %v490 = vld [vmem:[%s4 + $0x28] sm:$0xff]
    %v491 = vld [vmem:[%s4 + $0x30] sm:$0xff]
    %v492 = vld [vmem:[%s4 + $0x38] sm:$0xff]
    %v493 = vld [vmem:[%s4 + $0x40] sm:$0xff]
    %v494 = vld [vmem:[%s4 + $0x48] sm:$0xff]
    %v495 = vld [vmem:[%s4 + $0x50] sm:$0xff]
    %v496 = vld [vmem:[%s4 + $0x58] sm:$0xff]
    %v497 = vld [vmem:[%s4 + $0x60] sm:$0xff]
    %v498 = vld [vmem:[%s4 + $0x68] sm:$0xff]
    %v499 = vld [vmem:[%s4 + $0x70] sm:$0xff]
    %v500 = vld [vmem:[%s4 + $0x78] sm:$0xff]
    %v501 = vld [vmem:[%s4 + $0x80] sm:$0xff]
    %v502 = vld [vmem:[%s4 + $0x88] sm:$0xff]
    %v503 = vld [vmem:[%s4 + $0x90] sm:$0xff]
    %v504 = vld [vmem:[%s4 + $0x98] sm:$0xff]
    %v505 = vld [vmem:[%s4 + $0xa0] sm:$0xff]
    %v506 = vld [vmem:[%s4 + $0xa8] sm:$0xff]
    %v507 = vld [vmem:[%s4 + $0xb0] sm:$0xff]
    %v508 = vld [vmem:[%s4 + $0xb8] sm:$0xff]
    %v509 = vld [vmem:[%s4 + $0xc0] sm:$0xff]
    %v510 = vld [vmem:[%s4 + $0xc8] sm:$0xff]
    %v511 = vld [vmem:[%s4 + $0xd0] sm:$0xff]
    %v512 = vld [vmem:[%s4 + $0xd8] sm:$0xff]
    %v513 = vld [vmem:[%s4 + $0xe0] sm:$0xff]
    %v514 = vld [vmem:[%s4 + $0xe8] sm:$0xff]
    %v515 = vld [vmem:[%s4 + $0xf0] sm:$0xff]
    %v516 = vld [vmem:[%s4 + $0xf8] sm:$0xff]
    %517 = vmatprep.subr.mxu0 0.0
    %518 = vmatpush1.msra.mxu0 %v501
    %519 = vmatprep.subr.mxu0 0.0
    %520 = vmatpush1.msra.mxu0 %v502
    %521 = vmatprep.subr.mxu0 0.0
    %522 = vmatpush1.msra.mxu0 %v503
    %523 = vmatprep.subr.mxu0 0.0
    %524 = vmatpush1.msra.mxu0 %v504
    %525 = vmatprep.subr.mxu0 0.0
    %526 = vmatpush1.msra.mxu0 %v505
    %527 = vmatprep.subr.mxu0 0.0
    %528 = vmatpush1.msra.mxu0 %v506
    %529 = vmatprep.subr.mxu0 0.0
    %530 = vmatpush1.msra.mxu0 %v507
    %531 = vmatprep.subr.mxu0 0.0
    %532 = vmatpush1.msra.mxu0 %v508
    %533 = vmatprep.subr.mxu0 0.0
    %534 = vmatpush1.msra.mxu0 %v509
    %535 = vmatprep.subr.mxu0 0.0
    %536 = vmatpush1.msra.mxu0 %v510
    %537 = vmatprep.subr.mxu0 0.0
    %538 = vmatpush1.msra.mxu0 %v511
    %539 = vmatprep.subr.mxu0 0.0
    %540 = vmatpush1.msra.mxu0 %v512
    %541 = vmatprep.subr.mxu0 0.0
    %542 = vmatpush1.msra.mxu0 %v513
    %543 = vmatprep.subr.mxu0 0.0
    %544 = vmatpush1.msra.mxu0 %v514
    %545 = vmatprep.subr.mxu0 0.0
    %546 = vmatpush1.msra.mxu0 %v515
    %547 = vmatprep.subr.mxu0 0.0
    %548 = vmatpush1.msra.mxu0 %v516
    %549 = vmatprep.subr.mxu0 0.0
    %550 = vmatpush1.msra.mxu0 0.0
    %551 = vmatprep.subr.mxu0 0.0
    %552 = vmatpush1.msra.mxu0 0.0
    %553 = vmatprep.subr.mxu0 0.0
    %554 = vmatpush1.msra.mxu0 0.0
    %555 = vmatprep.subr.mxu0 0.0
    %556 = vmatpush1.msra.mxu0 0.0
    %557 = vmatprep.subr.mxu0 0.0
    %558 = vmatpush1.msra.mxu0 0.0
    %559 = vmatprep.subr.mxu0 0.0
    %560 = vmatpush1.msra.mxu0 0.0
    %561 = vmatprep.subr.mxu0 0.0
    %562 = vmatpush1.msra.mxu0 0.0
    %563 = vmatprep.subr.mxu0 0.0
    %564 = vmatpush1.msra.mxu0 0.0
    %565 = vmatprep.subr.mxu0 0.0
    %566 = vmatpush1.msra.mxu0 0.0
    %567 = vmatprep.subr.mxu0 0.0
    %568 = vmatpush1.msra.mxu0 0.0
    %569 = vmatprep.subr.mxu0 0.0
    %570 = vmatpush1.msra.mxu0 0.0
    %571 = vmatprep.subr.mxu0 0.0
    %572 = vmatpush1.msra.mxu0 0.0
    %573 = vmatprep.subr.mxu0 0.0
    %574 = vmatpush1.msra.mxu0 0.0
    %575 = vmatprep.subr.mxu0 0.0
    %576 = vmatpush1.msra.mxu0 0.0
    %577 = vmatprep.subr.mxu0 0.0
    %578 = vmatpush1.msra.mxu0 0.0
    %579 = vmatprep.subr.mxu0 0.0
    %580 = vmatpush1.msra.mxu0 0.0
    %581 = vmatprep.mubr.f32.mxu0 0.0
    %582 = vmatmul.mubr.f32.gmra.mrb[0].mxu0 %v476
    %v583 = vpop.f32.mrb[0].mxu0
    %v584 = vadd.f32 0.0, %v583
    %v585 = vpop.f32.mrb[0].mxu0
    %586 = vmatprep.mubr.f32.mxu0 0.0
    %587 = vmatmul.mubr.f32.gmra.mrb[0].mxu0 %v479
    %v588 = vpop.f32.mrb[0].mxu0
    %v589 = vadd.f32 0.0, %v588
    %v590 = vpop.f32.mrb[0].mxu0
    %591 = vmatprep.mubr.f32.mxu0 0.0
    %592 = vmatmul.mubr.f32.gmra.mrb[0].mxu0 %v480
    %v593 = vpop.f32.mrb[0].mxu0
    %v594 = vadd.f32 0.0, %v593
    %v595 = vpop.f32.mrb[0].mxu0
    %596 = vmatprep.mubr.f32.mxu0 0.0
    %597 = vmatmul.mubr.f32.gmra.mrb[0].mxu0 %v480
    %v598 = vpop.f32.mrb[0].mxu0
    %v599 = vadd.f32 0.0, %v598
    %v600 = vpop.f32.mrb[0].mxu0
    %601 = vmatprep.mubr.f32.mxu0 0.0
    %602 = vmatmul.mubr.f32.gmra.mrb[0].mxu0 %v477
    %v603 = vpop.f32.mrb[0].mxu0
    %v604 = vadd.f32 0.0, %v603
    %v605 = vpop.f32.mrb[0].mxu0
    %606 = vmatprep.mubr.f32.mxu0 0.0
    %607 = vmatmul.mubr.f32.gmra.mrb[0].mxu0 %v477
    %v608 = vpop.f32.mrb[0].mxu0
    %v609 = vadd.f32 0.0, %v608
    %v610 = vpop.f32.mrb[0].mxu0
    %611 = vdwg.mxu0
    %612 = vmatprep.subr.mxu0 0.0
    %613 = vmatpush1.msra.mxu0 %v485
    %614 = vmatprep.subr.mxu0 0.0
    %615 = vmatpush1.msra.mxu0 %v486
    %616 = vmatprep.subr.mxu0 0.0
    %617 = vmatpush1.msra.mxu0 %v487
    %618 = vmatprep.subr.mxu0 0.0
    %619 = vmatpush1.msra.mxu0 %v488
    %620 = vmatprep.subr.mxu0 0.0
    %621 = vmatpush1.msra.mxu0 %v489
    %622 = vmatprep.subr.mxu0 0.0
    %623 = vmatpush1.msra.mxu0 %v490
    %624 = vmatprep.subr.mxu0 0.0
    %625 = vmatpush1.msra.mxu0 %v491
    %626 = vmatprep.subr.mxu0 0.0
    %627 = vmatpush1.msra.mxu0 %v492
    %628 = vmatprep.subr.mxu0 0.0
    %629 = vmatpush1.msra.mxu0 %v493
    %630 = vmatprep.subr.mxu0 0.0
    %631 = vmatpush1.msra.mxu0 %v494
    %632 = vmatprep.subr.mxu0 0.0
    %633 = vmatpush1.msra.mxu0 %v495
    %634 = vmatprep.subr.mxu0 0.0
    %635 = vmatpush1.msra.mxu0 %v496
    %636 = vmatprep.subr.mxu0 0.0
    %637 = vmatpush1.msra.mxu0 %v497
    %638 = vmatprep.subr.mxu0 0.0
    %639 = vmatpush1.msra.mxu0 %v498
    %640 = vmatprep.subr.mxu0 0.0
    %641 = vmatpush1.msra.mxu0 %v499
    %642 = vmatprep.subr.mxu0 0.0
    %643 = vmatpush1.msra.mxu0 %v500
    %644 = vmatprep.subr.mxu0 0.0
    %645 = vmatpush1.msra.mxu0 0.0
    %646 = vmatprep.subr.mxu0 0.0
    %647 = vmatpush1.msra.mxu0 0.0
    %648 = vmatprep.subr.mxu0 0.0
    %649 = vmatpush1.msra.mxu0 0.0
    %650 = vmatprep.subr.mxu0 0.0
    %651 = vmatpush1.msra.mxu0 0.0
    %652 = vmatprep.subr.mxu0 0.0
    %653 = vmatpush1.msra.mxu0 0.0
    %654 = vmatprep.subr.mxu0 0.0
    %655 = vmatpush1.msra.mxu0 0.0
    %656 = vmatprep.subr.mxu0 0.0
    %657 = vmatpush1.msra.mxu0 0.0
    %658 = vmatprep.subr.mxu0 0.0
    %659 = vmatpush1.msra.mxu0 0.0
    %660 = vmatprep.subr.mxu0 0.0
    %661 = vmatpush1.msra.mxu0 0.0
    %662 = vmatprep.subr.mxu0 0.0
    %663 = vmatpush1.msra.mxu0 0.0
    %664 = vmatprep.subr.mxu0 0.0
    %665 = vmatpush1.msra.mxu0 0.0
    %666 = vmatprep.subr.mxu0 0.0
    %667 = vmatpush1.msra.mxu0 0.0
    %668 = vmatprep.subr.mxu0 0.0
    %669 = vmatpush1.msra.mxu0 0.0
    %670 = vmatprep.subr.mxu0 0.0
    %671 = vmatpush1.msra.mxu0 0.0
    %672 = vmatprep.subr.mxu0 0.0
    %673 = vmatpush1.msra.mxu0 0.0
    %674 = vmatprep.subr.mxu0 0.0
    %675 = vmatpush1.msra.mxu0 0.0
    %676 = vmatprep.mubr.f32.mxu0 0.0
    %677 = vmatmul.mubr.f32.gmra.mrb[0].mxu0 %v475
    %v678 = vpop.f32.mrb[0].mxu0
    %v679 = vadd.f32 %v584, %v678
    %v680 = vpop.f32.mrb[0].mxu0
    %681 = vmatprep.mubr.f32.mxu0 0.0
    %682 = vmatmul.mubr.f32.gmra.mrb[0].mxu0 %v478
    %v683 = vpop.f32.mrb[0].mxu0
    %v684 = vadd.f32 %v589, %v683
    %v685 = vpop.f32.mrb[0].mxu0
    %686 = vmatprep.mubr.f32.mxu0 0.0
    %687 = vmatmul.mubr.f32.gmra.mrb[0].mxu0 %v478
    %v688 = vpop.f32.mrb[0].mxu0
    %v689 = vadd.f32 %v594, %v688
    %v690 = vpop.f32.mrb[0].mxu0
    %691 = vmatprep.mubr.f32.mxu0 0.0
    %692 = vmatmul.mubr.f32.gmra.mrb[0].mxu0 %v479
    %v693 = vpop.f32.mrb[0].mxu0
    %v694 = vadd.f32 %v599, %v693
    %v695 = vpop.f32.mrb[0].mxu0
    %696 = vmatprep.mubr.f32.mxu0 0.0
    %697 = vmatmul.mubr.f32.gmra.mrb[0].mxu0 %v475
    %v698 = vpop.f32.mrb[0].mxu0
    %v699 = vadd.f32 %v604, %v698
    %v700 = vpop.f32.mrb[0].mxu0
    %701 = vmatprep.mubr.f32.mxu0 0.0
    %702 = vmatmul.mubr.f32.gmra.mrb[0].mxu0 %v476
    %v703 = vpop.f32.mrb[0].mxu0
    %v704 = vadd.f32 %v609, %v703
    %v705 = vpop.f32.mrb[0].mxu0
    %706 = vdwg.mxu0
    %v707 = vld [vmem:[%s5] sm:$0x1]
    %v709 = vlaneseq
    %v710 = vshrl.u32 %v709, 7
    %v711 = vsub.s32 0, %v710
    %v712 = vrot.slane %v707, %v711
    %v714 = vadd.f32 %v679, %v712
    %v715 = vadd.f32 %v684, %v712
    %v716 = vadd.f32 %v689, %v712
    %v717 = vadd.f32 %v694, %v712
    %v718 = vadd.f32 %v699, %v712
    %v719 = vadd.f32 %v704, %v712
    %vm720 = vcmask 23552
    %v721 = vsel %vm720, %v714, -inf
    %722 = vmax.xlane.f32.xlu0 %v721
    %v723 = vpop.xlane.xlu0 %722
    %v724 = vsel %vm720, %v715, -inf
    %725 = vmax.xlane.f32.xlu0 %v724
    %v726 = vpop.xlane.xlu0 %725
    %v727 = vsel %vm720, %v716, -inf
    %728 = vmax.xlane.f32.xlu0 %v727
    %v729 = vpop.xlane.xlu0 %728
    %v730 = vsel %vm720, %v717, -inf
    %731 = vmax.xlane.f32.xlu0 %v730
    %v732 = vpop.xlane.xlu0 %731
    %v733 = vsel %vm720, %v718, -inf
    %734 = vmax.xlane.f32.xlu0 %v733
    %v735 = vpop.xlane.xlu0 %734
    %v736 = vsel %vm720, %v719, -inf
    %737 = vmax.xlane.f32.xlu0 %v736
    %v738 = vpop.xlane.xlu0 %737
    %v739 = vsub.f32 %v714, %v723
    %v740 = vsub.f32 %v715, %v726
    %v741 = vsub.f32 %v716, %v729
    %v742 = vsub.f32 %v717, %v732
    %v743 = vsub.f32 %v718, %v735
    %v744 = vsub.f32 %v719, %v738
    %v745 = vmul.f32 %v739, 1.442695
    %v746 = vpow.pop %v745
    %v747 = vmul.f32 %v740, 1.442695
    %v748 = vpow.pop %v747
    %v749 = vmul.f32 %v741, 1.442695
    %v750 = vpow.pop %v749
    %v751 = vmul.f32 %v742, 1.442695
    %v752 = vpow.pop %v751
    %v753 = vmul.f32 %v743, 1.442695
    %v754 = vpow.pop %v753
    %v755 = vmul.f32 %v744, 1.442695
    %v756 = vpow.pop %v755
    %v757 = vsel %vm720, %v746, 0.0
    %758 = vadd.xlane.f32.xlu0 %v757
    %v759 = vpop.xlane.xlu0 %758
    %v760 = vsel %vm720, %v748, 0.0
    %761 = vadd.xlane.f32.xlu0 %v760
    %v762 = vpop.xlane.xlu0 %761
    %v763 = vsel %vm720, %v750, 0.0
    %764 = vadd.xlane.f32.xlu0 %v763
    %v765 = vpop.xlane.xlu0 %764
    %v766 = vsel %vm720, %v752, 0.0
    %767 = vadd.xlane.f32.xlu0 %v766
    %v768 = vpop.xlane.xlu0 %767
    %v769 = vsel %vm720, %v754, 0.0
    %770 = vadd.xlane.f32.xlu0 %v769
    %v771 = vpop.xlane.xlu0 %770
    %v772 = vsel %vm720, %v756, 0.0
    %773 = vadd.xlane.f32.xlu0 %v772
    %v774 = vpop.xlane.xlu0 %773
    %v775 = vlog2.pop %v759
    %v776 = vmul.f32 %v775, 0.6931472
    %v777 = vlog2.pop %v762
    %v778 = vmul.f32 %v777, 0.6931472
    %v779 = vlog2.pop %v765
    %v780 = vmul.f32 %v779, 0.6931472
    %v781 = vlog2.pop %v768
    %v782 = vmul.f32 %v781, 0.6931472
    %v783 = vlog2.pop %v771
    %v784 = vmul.f32 %v783, 0.6931472
    %v785 = vlog2.pop %v774
    %v786 = vmul.f32 %v785, 0.6931472
    %v787 = vadd.f32 %v723, %v776
    %v788 = vadd.f32 %v726, %v778
    %v789 = vadd.f32 %v729, %v780
    %v790 = vadd.f32 %v732, %v782
    %v791 = vadd.f32 %v735, %v784
    %v792 = vadd.f32 %v738, %v786
    %v793 = vsub.f32 %v714, %v787
    %v794 = vsub.f32 %v715, %v788
    %v795 = vsub.f32 %v716, %v789
    %v796 = vsub.f32 %v717, %v790
    %v797 = vsub.f32 %v718, %v791
    %v798 = vsub.f32 %v719, %v792
    %v799 = vlaneseq
    %v800 = vand.u32 %v799, 127
    %v801 = vld [vmem:[%s6] sm:$0xff]
    %v802 = vld [vmem:[%s6 + $0x8] sm:$0xff]
    %v803 = vld [vmem:[%s6 + $0x10] sm:$0xff]
    %v804 = vld [vmem:[%s6 + $0x18] sm:$0xff]
    %v805 = vld [vmem:[%s6 + $0x20] sm:$0xff]
    %v806 = vld [vmem:[%s6 + $0x28] sm:$0xff]
    %807 = vset.pattern.permute.xlu0 0
    %808 = vperm.xlu0 %807, %v801
    %v809 = vpop.permute.xlu0 %808
    %810 = vset.pattern.permute.xlu0 0
    %811 = vperm.xlu0 %810, %v802
    %v812 = vpop.permute.xlu0 %811
    %813 = vset.pattern.permute.xlu0 0
    %814 = vperm.xlu0 %813, %v803
    %v815 = vpop.permute.xlu0 %814
    %816 = vset.pattern.permute.xlu0 0
    %817 = vperm.xlu0 %816, %v804
    %v818 = vpop.permute.xlu0 %817
    %819 = vset.pattern.permute.xlu0 0
    %820 = vperm.xlu0 %819, %v805
    %v821 = vpop.permute.xlu0 %820
    %822 = vset.pattern.permute.xlu0 0
    %823 = vperm.xlu0 %822, %v806
    %v824 = vpop.permute.xlu0 %823
    %vm825 = vcmp.eq.s32.totalorder %v800, %v809
    %vm826 = vcmp.eq.s32.totalorder %v800, %v812
    %vm827 = vcmp.eq.s32.totalorder %v800, %v815
    %vm828 = vcmp.eq.s32.totalorder %v800, %v818
    %vm829 = vcmp.eq.s32.totalorder %v800, %v821
    %vm830 = vcmp.eq.s32.totalorder %v800, %v824
    %v831 = vsel %vm825, 1, 0
    %v832 = vsel %vm826, 1, 0
    %v833 = vsel %vm827, 1, 0
    %v834 = vsel %vm828, 1, 0
    %v835 = vsel %vm829, 1, 0
    %v836 = vsel %vm830, 1, 0
    %v837 = vcvt.s32.f32 %v831
    %v838 = vcvt.s32.f32 %v832
    %v839 = vcvt.s32.f32 %v833
    %v840 = vcvt.s32.f32 %v834
    %v841 = vcvt.s32.f32 %v835
    %v842 = vcvt.s32.f32 %v836
    %v843 = vmul.f32 %v837, %v793
    %v844 = vmul.f32 %v838, %v794
    %v845 = vmul.f32 %v839, %v795
    %v846 = vmul.f32 %v840, %v796
    %v847 = vmul.f32 %v841, %v797
    %v848 = vmul.f32 %v842, %v798
    %v849 = vsel %vm720, %v843, 0.0
    %v850 = vsel %vm720, %v844, 0.0
    %v851 = vadd.f32 %v849, %v850
    %v852 = vsel %vm720, %v845, 0.0
    %v853 = vadd.f32 %v851, %v852
    %v854 = vsel %vm720, %v846, 0.0
    %v855 = vadd.f32 %v853, %v854
    %v856 = vsel %vm720, %v847, 0.0
    %v857 = vadd.f32 %v855, %v856
    %v858 = vsel %vm720, %v848, 0.0
    %v859 = vadd.f32 %v857, %v858
    %860 = vadd.xlane.f32.xlu0 %v859
    %v861 = vpop.xlane.xlu0 %860
    %v862 = vrot.slane %v861, 4
    %v863 = vadd.f32 %v861, %v862
    %v864 = vrot.slane %v863, 2
    %v865 = vadd.f32 %v863, %v864
    %v866 = vrot.slane %v865, 1
    %v867 = vadd.f32 %v865, %v866
    %s868 = vtos %v867
    %s869 = ssub.f32 0.0, %s868
    %s870 = smul.f32 %s869, 0.020833334
    %v871 = vmul.f32 %v475, %v476
    %v872 = vmul.f32 %v478, %v479
    %873 = vadd.xlane.f32.xlu0 %v871
    %v874 = vpop.xlane.xlu0 %873
    %875 = vadd.xlane.f32.xlu0 %v872
    %v876 = vpop.xlane.xlu0 %875
    %v877 = vmul.f32 %v475, %v475
    %v878 = vmul.f32 %v478, %v478
    %879 = vadd.xlane.f32.xlu0 %v877
    %v880 = vpop.xlane.xlu0 %879
    %881 = vadd.xlane.f32.xlu0 %v878
    %v882 = vpop.xlane.xlu0 %881
    %v883 = vmax.f32 %v880, 1e-16
    %v884 = vmax.f32 %v882, 1e-16
    %v885 = vmul.f32 %v476, %v476
    %v886 = vmul.f32 %v479, %v479
    %887 = vadd.xlane.f32.xlu0 %v885
    %v888 = vpop.xlane.xlu0 %887
    %889 = vadd.xlane.f32.xlu0 %v886
    %v890 = vpop.xlane.xlu0 %889
    %v891 = vmax.f32 %v888, 1e-16
    %v892 = vmax.f32 %v890, 1e-16
    %v893 = vrsqrt.pop %v883
    %v894 = vrsqrt.pop %v884
    %v895 = vmul.f32 %v874, %v893
    %v896 = vmul.f32 %v876, %v894
    %v897 = vrsqrt.pop %v891
    %v898 = vrsqrt.pop %v892
    %v899 = vmul.f32 %v895, %v897
    %v900 = vmul.f32 %v896, %v898
    %v901 = vmul.f32 %v899, 0.6
    %v902 = vmul.f32 %v900, 0.6
    %v903 = vadd.f32 %v481, %v482
    %v904 = vadd.f32 %v483, %v484
    %v905 = vmul.f32 %v903, 0.2
    %v906 = vmul.f32 %v904, 0.2
    %v907 = vadd.f32 %v901, %v905
    %v908 = vadd.f32 %v902, %v906
    %v909 = vlaneseq
    %v910 = vshrl.u32 %v909, 7
    %v911 = vadd.s32 %v910, 8
    %vm912 = vcmp.lt.s32.totalorder %v910, 8
    %vm913 = vcmp.lt.s32.totalorder %v911, 8
    %v914 = vsel %vm912, 1.0, 0.0
    %v915 = vsel %vm913, 1.0, 0.0
    %v916 = vsub.f32 %v914, %v907
    %v917 = vsub.f32 %v915, %v908
    %v918 = vmul.f32 %v916, %v916
    %v919 = vmul.f32 %v917, %v917
    %v920 = vmul.f32 %v918, 0.5
    %v921 = vmul.f32 %v919, 0.5
    %vm922 = vcmask 7168
    %v923 = vsel %vm922, %v920, 0.0
    %v924 = vsel %vm922, %v921, 0.0
    %v925 = vadd.f32 %v923, %v924
    %926 = vadd.xlane.f32.xlu0 %v925
    %v927 = vpop.xlane.xlu0 %926
    %v928 = vrot.slane %v927, 4
    %v929 = vadd.f32 %v927, %v928
    %v930 = vrot.slane %v929, 2
    %v931 = vadd.f32 %v929, %v930
    %v932 = vrot.slane %v931, 1
    %v933 = vadd.f32 %v931, %v932
    %s934 = vtos %v933
    %s935 = smul.f32 %s934, 0.1
    %s936 = sadd.f32 %s870, %s935
    %s937 = scalar_lea.smem [#allocation9], 0
    %938 = sst [smem:[%s937]] %s936
    // Predicated region
    $region30: #{_lambda_.1} parent=1 // pred_check
      _
    $region31: #{_lambda_.1} parent=1 // pred_check_branch
      %940 = sbr.rel (0) target = $region33
    $region32: #{_lambda_.1} parent=1 // pred_region
      %s942 = ssub.s32 256, 256
      %943 = vsyncadd [#allocation7], %s942
      %s944 = sshll.u32 [#allocation6], 4
      %s945 = int_to_ptr.vmem [resolvable:$true] %s944
      %950 = dma.vmem_to_hbm [thread:$0]  %s945, 256, %s8, [#allocation7], 128, 128, 8
    $region33: #{_lambda_.1} parent=1 // pred_fallthru
      _
    // Predicated region
    $region34: #{_lambda_.1} parent=1 // pred_check
      _
    $region35: #{_lambda_.1} parent=1 // pred_check_branch
      %952 = sbr.rel (0) target = $region37
    $region36: #{_lambda_.1} parent=1 // pred_region
      %s954 = ssub.s32 16, 16
      %955 = vsyncadd [#allocation8], %s954
      %958 = dma.smem_to_hbm [#allocation9], 16, %s9, [#allocation8]
    $region37: #{_lambda_.1} parent=1 // pred_fallthru
      _
    // Predicated region
    $region38: #{_lambda_.1} parent=1 // pred_check
      _
    $region39: #{_lambda_.1} parent=1 // pred_check_branch
      %960 = sbr.rel (0) target = $region41
    $region40: #{_lambda_.1} parent=1 // pred_region
      %961 = dma.done [#allocation7], 256
    $region41: #{_lambda_.1} parent=1 // pred_fallthru
      _
    // Predicated region
    $region42: #{_lambda_.1} parent=1 // pred_check
      _
    $region43: #{_lambda_.1} parent=1 // pred_check_branch
      %963 = sbr.rel (0) target = $region45
    $region44: #{_lambda_.1} parent=1 // pred_region
      %964 = dma.done [#allocation8], 16
    $region45: #{_lambda_.1} parent=1 // pred_fallthru
      _
    %965 = sfence
    %966 = vsyncpa [#allocation7], 1
    %967 = vsyncpa [#allocation8], 1

</llo_original>
